<compile_context>
chip_gen: v7x
topology: tpu7x:2x2x1
jax: 0.10.0
libtpu: 0.0.40
codegen_flags: <defaults>
</compile_context>

<pallas_src>
import functools

import numpy as np
import jax
import jax.numpy as jnp
from jax import lax
from jax.experimental import pallas as pl
from jax.experimental.pallas import tpu as pltpu

LANE = 128


def _round_up(x, m):
    return ((x + m - 1) // m) * m


def _vmem_limit_bytes():
    # Leave explicit headroom for compiler-internal scratch / semaphores.
    try:
        cap = pltpu.get_tpu_info().vmem_capacity_bytes
    except Exception:
        cap = 64 << 20
    return int(min(cap - (16 << 20), 100 << 20))


def _pick_th(C, H, Wp, budget=2 << 20):
    """Row-tile height: multiple of 8, keeps the f32 (C, TH, Wp) logits slab small."""
    h8 = _round_up(max(H, 1), 8)
    for th in (256, 128, 64, 32, 16, 8):
        if th <= h8 and C * th * Wp * 4 <= budget:
            return th
    return 8


# ----------------------------------------------------------------------------
# Kernel 1: fused bilinear upsample (align_corners=True) + softmax CE
# (ignore_index) + lovasz ingredients.
#
# Grid = (N, H_pad // TH); axis 0 "parallel" (megacore), axis 1 "arbitrary".
# Per image (hi == 0) the width interpolation t[c] = pred[n, c] @ RwT is computed
# on the MXU and cached in VMEM scratch; every row tile then does one batched
# bf16 matmul Rh_rows @ t -> (C, TH, Wp) logits, followed by the CE / softmax /
# err / fg math in lane-dense layout.  Scalar reductions accumulate in VMEM
# scratch and are written once per image as lane-padded partials.
# ----------------------------------------------------------------------------
def _fused_upsample_ce_kernel(x_ref, rh_ref, rwt_ref, lab_ref,
                              nerr_ref, fg_ref, loss_ref, cnt_ref, gts_ref,
                              t_scratch, loss_acc, cnt_acc, gts_acc,
                              *, ignore_index, n_classes):
    hi = pl.program_id(1)
    C = n_classes

    @pl.when(hi == 0)
    def _():
        loss_acc[...] = jnp.zeros_like(loss_acc)
        cnt_acc[...] = jnp.zeros_like(cnt_acc)
        gts_acc[...] = jnp.zeros_like(gts_acc)
        # Width interpolation for this image, cached across all of its row tiles.
        rwt = rwt_ref[...]                                           # (w, Wp) bf16
        for c in range(C):                                           # each result stored
            t_scratch[c] = jnp.dot(                                  # straight to scratch
                x_ref[0, c], rwt,
                preferred_element_type=jnp.float32).astype(t_scratch.dtype)

    # ---- height interpolation for this row tile (batched bf16 MXU matmul) ----
    rh = rh_ref[...]                                                 # (TH, h)  bf16
    t = t_scratch[...]                                               # (C, h, Wp) bf16
    rh_b = jnp.broadcast_to(rh[None], (C,) + rh.shape)               # (C, TH, h)
    logits = lax.dot_general(
        rh_b, t, (((2,), (1,)), ((0,), (0,))),
        preferred_element_type=jnp.float32)                          # (C, TH, Wp) f32

    lab = lab_ref[0]                                                 # (TH, Wp) i32
    validf = (lab != ignore_index).astype(jnp.float32)               # (TH, Wp)

    # ---- softmax cross-entropy with ignore_index ----
    m = jnp.max(logits, axis=0)                                      # (TH, Wp)
    e = jnp.exp(logits - m[None])                                    # (C, TH, Wp)
    s = jnp.sum(e, axis=0)                                           # (TH, Wp)
    lse = jnp.log(s) + m

    cls = lax.broadcasted_iota(jnp.int32, logits.shape, 0)           # (C, TH, Wp)
    onehot = (cls == lab[None]).astype(jnp.float32)
    xt = jnp.sum(onehot * logits, axis=0)                            # (TH, Wp)

    loss_acc[...] += jnp.sum(validf * (lse - xt), keepdims=True)
    cnt_acc[...] += jnp.sum(validf, keepdims=True)

    # ---- lovasz ingredients: -|fg - p_c| (sort key) and fg, both masked by valid ----
    probs = e * pl.reciprocal(s, approx=True)[None]                  # EUP, not VALU divide
    fg = onehot * validf[None]
    err = jnp.abs(onehot - probs) * validf[None]

    nerr_ref[:, 0] = (-err).astype(nerr_ref.dtype)                   # (C, TH, Wp) bf16
    fg_ref[:, 0] = fg.astype(fg_ref.dtype)
    gts_acc[...] += jnp.sum(jnp.sum(fg, axis=2), axis=1, keepdims=True)   # (C, 1)

    @pl.when(hi == pl.num_programs(1) - 1)
    def _():
        loss_ref[...] = jnp.broadcast_to(loss_acc[...], loss_ref.shape)
        cnt_ref[...] = jnp.broadcast_to(cnt_acc[...], cnt_ref.shape)
        gts_ref[...] = jnp.broadcast_to(gts_acc[...], gts_ref.shape)


def fused_upsample_ce(pred_bf16, rh_bf16, rwt_bf16, labels,
                      *, C, N, h, w, Hp, Wp, TH, ignore_index):
    n_h = Hp // TH
    kernel = functools.partial(_fused_upsample_ce_kernel,
                               ignore_index=ignore_index, n_classes=C)
    return pl.pallas_call(
        kernel,
        out_shape=(
            jax.ShapeDtypeStruct((C, N, Hp, Wp), jnp.bfloat16),   # -err (sort key)
            jax.ShapeDtypeStruct((C, N, Hp, Wp), jnp.bfloat16),   # fg
            jax.ShapeDtypeStruct((1, N * LANE), jnp.float32),     # per-image CE loss sums
            jax.ShapeDtypeStruct((1, N * LANE), jnp.float32),     # per-image valid counts
            jax.ShapeDtypeStruct((C, N * LANE), jnp.float32),     # per-image per-class fg
        ),
        grid_spec=pltpu.PrefetchScalarGridSpec(
            num_scalar_prefetch=0,
            grid=(N, n_h),
            in_specs=[
                pl.BlockSpec((1, C, h, w), lambda n, hi: (n, 0, 0, 0)),
                pl.BlockSpec((TH, h), lambda n, hi: (hi, 0)),
                pl.BlockSpec((w, Wp), lambda n, hi: (0, 0)),
                pl.BlockSpec((1, TH, Wp), lambda n, hi: (n, hi, 0)),
            ],
            out_specs=[
                pl.BlockSpec((C, 1, TH, Wp), lambda n, hi: (0, n, hi, 0)),
                pl.BlockSpec((C, 1, TH, Wp), lambda n, hi: (0, n, hi, 0)),
                pl.BlockSpec((1, LANE), lambda n, hi: (0, n)),
                pl.BlockSpec((1, LANE), lambda n, hi: (0, n)),
                pl.BlockSpec((C, LANE), lambda n, hi: (0, n)),
            ],
            scratch_shapes=[
                pltpu.VMEM((C, h, Wp), jnp.bfloat16),   # cached width interpolation
                pltpu.VMEM((1, 1), jnp.float32),        # CE loss sum
                pltpu.VMEM((1, 1), jnp.float32),        # valid count
                pltpu.VMEM((C, 1), jnp.float32),        # per-class fg totals
            ],
        ),
        compiler_params=pltpu.CompilerParams(
            dimension_semantics=("parallel", "arbitrary"),
            vmem_limit_bytes=_vmem_limit_bytes(),
        ),
    )(pred_bf16, rh_bf16, rwt_bf16, labels)


# ----------------------------------------------------------------------------
# Kernel 2: lovasz-softmax from per-class descending-sorted (-err, fg).
# Carry-based tiled cumsum: each grid step processes K_SUB chunks of TP=512
# pixels via a constant (512, 512) upper-triangular bf16 matmul (exact: {0,1}
# operands, f32 accumulation) plus (C, 1) running carries in VMEM scratch.
# ----------------------------------------------------------------------------
def _lovasz_kernel(nerr_ref, fg_ref, gts_ref, tri_ref, out_ref,
                   carry_cs, carry_j, acc, *, tp, k_sub):
    i = pl.program_id(0)

    @pl.when(i == 0)
    def _():
        carry_cs[...] = jnp.zeros_like(carry_cs)
        carry_j[...] = jnp.zeros_like(carry_j)
        acc[...] = jnp.zeros_like(acc)

    gts = gts_ref[...]                                    # (C, 1) f32
    tri = tri_ref[...]                                    # (tp, tp) bf16

    for k in range(k_sub):                                # static chunk loop (amortizes
        sl = slice(k * tp, (k + 1) * tp)                  # per-grid-step overhead)
        err = -(nerr_ref[:, sl].astype(jnp.float32))      # (C, tp)
        fg = fg_ref[:, sl]                                # (C, tp) bf16

        local_cs = jnp.dot(fg, tri, preferred_element_type=jnp.float32)   # (C, tp)
        cs = local_cs + carry_cs[...]

        base = (i * k_sub + k) * tp + 1
        pos = (lax.broadcasted_iota(jnp.int32, cs.shape, 1) + base).astype(jnp.float32)

        inter = gts - cs
        union = gts + pos - cs                            # >= 1 always
        jacc = 1.0 - inter * pl.reciprocal(union, approx=True)

        prev = pltpu.roll(jacc, shift=1, axis=1)
        col = lax.broadcasted_iota(jnp.int32, cs.shape, 1)
        prev = jnp.where(col == 0, carry_j[...], prev)

        acc[...] += jnp.sum(err * (jacc - prev), axis=1, keepdims=True)
        carry_cs[...] = cs[:, tp - 1:tp]
        carry_j[...] = jacc[:, tp - 1:tp]

    @pl.when(i == pl.num_programs(0) - 1)
    def _():
        present = (gts > 0.0).astype(jnp.float32)         # (C, 1)
        num = jnp.sum(acc[...] * present, keepdims=True)  # (1, 1)
        den = jnp.maximum(jnp.sum(present), 1.0)
        out_ref[...] = num / den


def lovasz_from_sorted(nerr_s, fg_s, gts, *, tp=512):
    C, P = nerr_s.shape
    # P is always a multiple of 1024 (H_pad % 8 == 0, W_pad % 128 == 0).
    if P % (8 * tp) == 0:
        tpl = 8 * tp
    elif P % (4 * tp) == 0:
        tpl = 4 * tp
    elif P % (2 * tp) == 0:
        tpl = 2 * tp
    else:
        tpl = tp
    k_sub = tpl // tp
    tri = jnp.triu(jnp.ones((tp, tp), jnp.float32)).astype(jnp.bfloat16)
    return pl.pallas_call(
        functools.partial(_lovasz_kernel, tp=tp, k_sub=k_sub),
        out_shape=jax.ShapeDtypeStruct((1, 1), jnp.float32),
        grid_spec=pltpu.PrefetchScalarGridSpec(
            num_scalar_prefetch=0,
            grid=(P // tpl,),
            in_specs=[
                pl.BlockSpec((C, tpl), lambda i: (0, i)),
                pl.BlockSpec((C, tpl), lambda i: (0, i)),
                pl.BlockSpec((C, 1), lambda i: (0, 0)),
                pl.BlockSpec((tp, tp), lambda i: (0, 0)),
            ],
            out_specs=pl.BlockSpec((1, 1), lambda i: (0, 0)),
            scratch_shapes=[
                pltpu.VMEM((C, 1), jnp.float32),   # running cumsum(fg)
                pltpu.VMEM((C, 1), jnp.float32),   # previous jaccard
                pltpu.VMEM((C, 1), jnp.float32),   # per-class loss accumulator
            ],
        ),
        compiler_params=pltpu.CompilerParams(
            dimension_semantics=("arbitrary",),
            vmem_limit_bytes=_vmem_limit_bytes(),
        ),
    )(nerr_s, fg_s, gts.astype(jnp.float32), tri)


# ----------------------------------------------------------------------------
# Glue
# ----------------------------------------------------------------------------
def bilinear_matrix(out_size, in_size):
    # align_corners=True interpolation weights as a dense (out_size, in_size) matrix.
    if out_size > 1:
        src = jnp.arange(out_size, dtype=jnp.float32) * (in_size - 1) / (out_size - 1)
    else:
        src = jnp.zeros((out_size,), jnp.float32)
    lo = jnp.clip(jnp.floor(src).astype(jnp.int32), 0, max(in_size - 2, 0))
    frac = src - lo.astype(jnp.float32)
    rows = jnp.arange(out_size)
    M = jnp.zeros((out_size, in_size), jnp.float32)
    M = M.at[rows, lo].add(1.0 - frac)
    M = M.at[rows, jnp.minimum(lo + 1, in_size - 1)].add(frac)
    return M


def criterion_ohem_dsn2(preds, target, ignore_index=255):
    pred0 = preds[0]                           # (N, C, h, w)  NCHW
    N, C, h, w = pred0.shape
    H, W = target.shape[1], target.shape[2]

    # Pad spatial dims so tiles are lane/sublane aligned.  Padded rows/cols get
    # zero interpolation weights + ignore_index labels -> valid=0, err=fg=0 and
    # contribute exactly 0 to both losses.
    Wp = _round_up(max(W, 1), LANE)
    TH = _pick_th(C, H, Wp)
    Hp = _round_up(max(H, 1), TH)

    rh = jnp.pad(bilinear_matrix(H, h), ((0, Hp - H), (0, 0)))        # (Hp, h)
    rwt = jnp.pad(bilinear_matrix(W, w).T, ((0, 0), (0, Wp - W)))     # (w, Wp)
    labels = jnp.pad(target.astype(jnp.int32),
                     ((0, 0), (0, Hp - H), (0, Wp - W)),
                     constant_values=ignore_index)                    # (N, Hp, Wp)

    nerr, fg, loss_p, cnt_p, gts_p = fused_upsample_ce(
        pred0.astype(jnp.bfloat16), rh.astype(jnp.bfloat16), rwt.astype(jnp.bfloat16),
        labels, C=C, N=N, h=h, w=w, Hp=Hp, Wp=Wp, TH=TH, ignore_index=ignore_index)

    loss_sum = jnp.sum(loss_p[0, ::LANE])
    cnt = jnp.sum(cnt_p[0, ::LANE])
    gts = jnp.sum(gts_p[:, ::LANE], axis=1, keepdims=True)            # (C, 1)

    # PyTorch CE(reduction='mean') is NaN when every pixel is ignored; guard 0/0
    # (loss_sum is 0 in that case, so loss1 becomes 0).
    loss1 = loss_sum / jnp.maximum(cnt, 1.0)

    P = N * Hp * Wp
    nerr2 = nerr.reshape(C, P)     # free reshapes: already lane-dense (C, P)
    fg2 = fg.reshape(C, P)

    # TODO(synk): the per-class descending sort (torch.sort) has no clean Pallas
    # TPU primitive; a single XLA key+payload sort (ascending on -err, carrying
    # fg) replaces the old argsort + 2 gathers.  Ignored/padded pixels (err==0)
    # sort to the tail and contribute exactly 0, matching the reference filter.
    nerr_s, fg_s = lax.sort((nerr2, fg2), dimension=1, num_keys=1, is_stable=False)

    loss2 = lovasz_from_sorted(nerr_s, fg_s, gts)[0, 0]
    return loss1 + loss2


# ----------------------------------------------------------------------------
# Pure NumPy reference of the PyTorch semantics (for verification)
# ----------------------------------------------------------------------------
def _np_bilinear_matrix(out_size, in_size):
    src = (np.arange(out_size) * (in_size - 1) / (out_size - 1)
           if out_size > 1 else np.zeros(out_size))
    lo = np.clip(np.floor(src).astype(np.int64), 0, max(in_size - 2, 0))
    frac = src - lo
    M = np.zeros((out_size, in_size), np.float64)
    M[np.arange(out_size), lo] += 1 - frac
    M[np.arange(out_size), np.minimum(lo + 1, in_size - 1)] += frac
    return M


def reference_numpy(pred0, target, ignore_index=255):
    x = np.asarray(pred0, np.float64)
    t = np.asarray(target, np.int64)
    N, C, h, w = x.shape
    H, W = t.shape[1], t.shape[2]
    rh = _np_bilinear_matrix(H, h)
    rw = _np_bilinear_matrix(W, w)
    up = np.einsum("Hh,nchw,Ww->ncHW", rh, x, rw)

    logits = up.transpose(0, 2, 3, 1).reshape(-1, C)
    labels = t.reshape(-1)
    valid = labels != ignore_index

    m = logits.max(axis=1, keepdims=True)
    e = np.exp(logits - m)
    s = e.sum(axis=1, keepdims=True)
    lse = np.log(s) + m
    logp = logits - lse
    loss1 = -logp[valid, labels[valid]].mean()

    probs = e / s
    vp, vl = probs[valid], labels[valid]
    losses = []
    for c in range(C):
        fgc = (vl == c).astype(np.float64)
        if fgc.sum() == 0:
            continue
        err = np.abs(fgc - vp[:, c])
        perm = np.argsort(-err, kind="stable")
        err_s, fg_s = err[perm], fgc[perm]
        gts = fg_s.sum()
        inter = gts - np.cumsum(fg_s)
        union = gts + np.cumsum(1.0 - fg_s)
        jac = 1.0 - inter / union
        jac[1:] = jac[1:] - jac[:-1]
        losses.append((err_s * jac).sum())
    loss2 = np.mean(losses) if losses else 0.0
    return loss1 + loss2


# ----------------------------------------------------------------------------
if __name__ == "__main__":
    key = jax.random.PRNGKey(0)
    k1, k2, k3, k4 = jax.random.split(key, 4)

    N, C, h, w, H, W = 2, 4, 8, 8, 16, 16
    pred0 = jax.random.normal(k1, (N, C, h, w), jnp.float32)
    pred_aux = jax.random.normal(k4, (N, C, h, w), jnp.float32)   # unused (DSN aux head)
    target = jax.random.randint(k2, (N, H, W), 0, C).astype(jnp.int32)
    ign = jax.random.uniform(k3, (N, H, W)) < 0.1
    target = jnp.where(ign, 255, target)

    loss = criterion_ohem_dsn2((pred0, pred_aux), target)
    loss = jax.block_until_ready(loss)

    ref = reference_numpy(pred0, target)
    # Tolerance relaxed vs the f32 version: bf16 MXU operands, bf16 err storage
    # and approx reciprocals perturb the result at the ~1e-2 level.
    np.testing.assert_allclose(float(loss), float(ref), rtol=2e-2, atol=2e-2)
    assert np.isfinite(float(loss))
    print("KERNEL_OK")
</pallas_src>

<mosaic_0001>
module attributes {stable_mosaic.version = 11 : i64} {
  func.func @_fused_upsample_ce_kernel(%arg0: i32, %arg1: i32, %arg2: memref<1x4x8x8xbf16, #tpu.memory_space<vmem>>, %arg3: memref<16x8xbf16, #tpu.memory_space<vmem>>, %arg4: memref<8x128xbf16, #tpu.memory_space<vmem>>, %arg5: memref<1x16x128xi32, #tpu.memory_space<vmem>>, %arg6: memref<4x1x16x128xbf16, #tpu.memory_space<vmem>>, %arg7: memref<4x1x16x128xbf16, #tpu.memory_space<vmem>>, %arg8: memref<1x128xf32, #tpu.memory_space<vmem>>, %arg9: memref<1x128xf32, #tpu.memory_space<vmem>>, %arg10: memref<4x128xf32, #tpu.memory_space<vmem>>, %arg11: memref<4x8x128xbf16, #tpu.memory_space<vmem>>, %arg12: memref<1x1xf32, #tpu.memory_space<vmem>>, %arg13: memref<1x1xf32, #tpu.memory_space<vmem>>, %arg14: memref<4x1xf32, #tpu.memory_space<vmem>>) attributes {dimension_semantics = [#tpu.dimension_semantics<parallel>, #tpu.dimension_semantics<arbitrary>], iteration_bounds = array<i64: 2, 1>, scalar_prefetch = 0 : i64, scratch_operands = 4 : i64, tpu.core_type = #tpu.core_type<tc>, window_params = [{transform_indices = @transform_0, window_bounds = array<i64: 1, 4, 8, 8>}, {transform_indices = @transform_1, window_bounds = array<i64: 16, 8>}, {pipeline_mode = #tpu.pipeline_mode<synchronous>, transform_indices = @transform_2, window_bounds = array<i64: 8, 128>}, {transform_indices = @transform_3, window_bounds = array<i64: 1, 16, 128>}, {transform_indices = @transform_4, window_bounds = array<i64: 4, 1, 16, 128>}, {transform_indices = @transform_5, window_bounds = array<i64: 4, 1, 16, 128>}, {transform_indices = @transform_6, window_bounds = array<i64: 1, 128>}, {transform_indices = @transform_7, window_bounds = array<i64: 1, 128>}, {transform_indices = @transform_8, window_bounds = array<i64: 4, 128>}]} {
    %c0_i32 = arith.constant 0 : i32
    %0 = arith.cmpi eq, %arg1, %c0_i32 : i32
    %1 = arith.extui %0 : i1 to i32
    %c0_i32_0 = arith.constant 0 : i32
    %2 = arith.cmpi ne, %1, %c0_i32_0 : i32
    scf.if %2 {
      %cst_38 = arith.constant 0.000000e+00 : f32
      %80 = vector.broadcast %cst_38 : f32 to vector<1x1xf32>
      %c0_39 = arith.constant 0 : index
      %c0_40 = arith.constant 0 : index
      %81 = vector.load %arg12[%c0_39, %c0_40] : memref<1x1xf32, #tpu.memory_space<vmem>>, vector<1x1xf32>
      tpu.vector_store %arg12[%c0_39, %c0_40], %80 {strides = array<i32>} : memref<1x1xf32, #tpu.memory_space<vmem>>, vector<1x1xf32>,
      %cst_41 = arith.constant 0.000000e+00 : f32
      %82 = vector.broadcast %cst_41 : f32 to vector<1x1xf32>
      %c0_42 = arith.constant 0 : index
      %c0_43 = arith.constant 0 : index
      %83 = vector.load %arg13[%c0_42, %c0_43] : memref<1x1xf32, #tpu.memory_space<vmem>>, vector<1x1xf32>
      tpu.vector_store %arg13[%c0_42, %c0_43], %82 {strides = array<i32>} : memref<1x1xf32, #tpu.memory_space<vmem>>, vector<1x1xf32>,
      %cst_44 = arith.constant 0.000000e+00 : f32
      %84 = vector.broadcast %cst_44 : f32 to vector<4x1xf32>
      %c0_45 = arith.constant 0 : index
      %c0_46 = arith.constant 0 : index
      %85 = vector.load %arg14[%c0_45, %c0_46] : memref<4x1xf32, #tpu.memory_space<vmem>>, vector<4x1xf32>
      tpu.vector_store %arg14[%c0_45, %c0_46], %84 {strides = array<i32>} : memref<4x1xf32, #tpu.memory_space<vmem>>, vector<4x1xf32>,
      %c0_47 = arith.constant 0 : index
      %c0_48 = arith.constant 0 : index
      %86 = vector.load %arg4[%c0_47, %c0_48] : memref<8x128xbf16, #tpu.memory_space<vmem>>, vector<8x128xbf16>
      %c0_49 = arith.constant 0 : index
      %c0_50 = arith.constant 0 : index
      %c0_51 = arith.constant 0 : index
      %c0_52 = arith.constant 0 : index
      %87 = vector.load %arg2[%c0_49, %c0_50, %c0_51, %c0_52] : memref<1x4x8x8xbf16, #tpu.memory_space<vmem>>, vector<1x1x8x8xbf16>
      %88 = vector.shape_cast %87 : vector<1x1x8x8xbf16> to vector<8x8xbf16>
      %cst_53 = arith.constant dense<0.000000e+00> : vector<8x128xf32>
      %89 = tpu.matmul %88, %86, %cst_53 {dimension_numbers = #tpu.dot_dimension_numbers<[1], [0], [0], [1], [0, 0, 1, 1], [], []>} : vector<8x8xbf16>, vector<8x128xbf16>, vector<8x128xf32> -> vector<8x128xf32>
      %90 = arith.truncf %89 : vector<8x128xf32> to vector<8x128xbf16>
      %c0_54 = arith.constant 0 : index
      %c0_55 = arith.constant 0 : index
      %c0_56 = arith.constant 0 : index
      %91 = vector.load %arg11[%c0_54, %c0_55, %c0_56] : memref<4x8x128xbf16, #tpu.memory_space<vmem>>, vector<1x8x128xbf16>
      %92 = vector.shape_cast %91 : vector<1x8x128xbf16> to vector<8x128xbf16>
      %93 = vector.shape_cast %90 : vector<8x128xbf16> to vector<1x8x128xbf16>
      tpu.vector_store %arg11[%c0_54, %c0_55, %c0_56], %93 {strides = array<i32>} : memref<4x8x128xbf16, #tpu.memory_space<vmem>>, vector<1x8x128xbf16>,
      %c0_57 = arith.constant 0 : index
      %c1 = arith.constant 1 : index
      %c0_58 = arith.constant 0 : index
      %c0_59 = arith.constant 0 : index
      %94 = vector.load %arg2[%c0_57, %c1, %c0_58, %c0_59] : memref<1x4x8x8xbf16, #tpu.memory_space<vmem>>, vector<1x1x8x8xbf16>
      %95 = vector.shape_cast %94 : vector<1x1x8x8xbf16> to vector<8x8xbf16>
      %cst_60 = arith.constant dense<0.000000e+00> : vector<8x128xf32>
      %96 = tpu.matmul %95, %86, %cst_60 {dimension_numbers = #tpu.dot_dimension_numbers<[1], [0], [0], [1], [0, 0, 1, 1], [], []>} : vector<8x8xbf16>, vector<8x128xbf16>, vector<8x128xf32> -> vector<8x128xf32>
      %97 = arith.truncf %96 : vector<8x128xf32> to vector<8x128xbf16>
      %c1_61 = arith.constant 1 : index
      %c0_62 = arith.constant 0 : index
      %c0_63 = arith.constant 0 : index
      %98 = vector.load %arg11[%c1_61, %c0_62, %c0_63] : memref<4x8x128xbf16, #tpu.memory_space<vmem>>, vector<1x8x128xbf16>
      %99 = vector.shape_cast %98 : vector<1x8x128xbf16> to vector<8x128xbf16>
      %100 = vector.shape_cast %97 : vector<8x128xbf16> to vector<1x8x128xbf16>
      tpu.vector_store %arg11[%c1_61, %c0_62, %c0_63], %100 {strides = array<i32>} : memref<4x8x128xbf16, #tpu.memory_space<vmem>>, vector<1x8x128xbf16>,
      %c0_64 = arith.constant 0 : index
      %c2 = arith.constant 2 : index
      %c0_65 = arith.constant 0 : index
      %c0_66 = arith.constant 0 : index
      %101 = vector.load %arg2[%c0_64, %c2, %c0_65, %c0_66] : memref<1x4x8x8xbf16, #tpu.memory_space<vmem>>, vector<1x1x8x8xbf16>
      %102 = vector.shape_cast %101 : vector<1x1x8x8xbf16> to vector<8x8xbf16>
      %cst_67 = arith.constant dense<0.000000e+00> : vector<8x128xf32>
      %103 = tpu.matmul %102, %86, %cst_67 {dimension_numbers = #tpu.dot_dimension_numbers<[1], [0], [0], [1], [0, 0, 1, 1], [], []>} : vector<8x8xbf16>, vector<8x128xbf16>, vector<8x128xf32> -> vector<8x128xf32>
      %104 = arith.truncf %103 : vector<8x128xf32> to vector<8x128xbf16>
      %c2_68 = arith.constant 2 : index
      %c0_69 = arith.constant 0 : index
      %c0_70 = arith.constant 0 : index
      %105 = vector.load %arg11[%c2_68, %c0_69, %c0_70] : memref<4x8x128xbf16, #tpu.memory_space<vmem>>, vector<1x8x128xbf16>
      %106 = vector.shape_cast %105 : vector<1x8x128xbf16> to vector<8x128xbf16>
      %107 = vector.shape_cast %104 : vector<8x128xbf16> to vector<1x8x128xbf16>
      tpu.vector_store %arg11[%c2_68, %c0_69, %c0_70], %107 {strides = array<i32>} : memref<4x8x128xbf16, #tpu.memory_space<vmem>>, vector<1x8x128xbf16>,
      %c0_71 = arith.constant 0 : index
      %c3 = arith.constant 3 : index
      %c0_72 = arith.constant 0 : index
      %c0_73 = arith.constant 0 : index
      %108 = vector.load %arg2[%c0_71, %c3, %c0_72, %c0_73] : memref<1x4x8x8xbf16, #tpu.memory_space<vmem>>, vector<1x1x8x8xbf16>
      %109 = vector.shape_cast %108 : vector<1x1x8x8xbf16> to vector<8x8xbf16>
      %cst_74 = arith.constant dense<0.000000e+00> : vector<8x128xf32>
      %110 = tpu.matmul %109, %86, %cst_74 {dimension_numbers = #tpu.dot_dimension_numbers<[1], [0], [0], [1], [0, 0, 1, 1], [], []>} : vector<8x8xbf16>, vector<8x128xbf16>, vector<8x128xf32> -> vector<8x128xf32>
      %111 = arith.truncf %110 : vector<8x128xf32> to vector<8x128xbf16>
      %c3_75 = arith.constant 3 : index
      %c0_76 = arith.constant 0 : index
      %c0_77 = arith.constant 0 : index
      %112 = vector.load %arg11[%c3_75, %c0_76, %c0_77] : memref<4x8x128xbf16, #tpu.memory_space<vmem>>, vector<1x8x128xbf16>
      %113 = vector.shape_cast %112 : vector<1x8x128xbf16> to vector<8x128xbf16>
      %114 = vector.shape_cast %111 : vector<8x128xbf16> to vector<1x8x128xbf16>
      tpu.vector_store %arg11[%c3_75, %c0_76, %c0_77], %114 {strides = array<i32>} : memref<4x8x128xbf16, #tpu.memory_space<vmem>>, vector<1x8x128xbf16>,
    } else {
    }
    %c0 = arith.constant 0 : index
    %c0_1 = arith.constant 0 : index
    %3 = vector.load %arg3[%c0, %c0_1] : memref<16x8xbf16, #tpu.memory_space<vmem>>, vector<16x8xbf16>
    %c0_2 = arith.constant 0 : index
    %c0_3 = arith.constant 0 : index
    %c0_4 = arith.constant 0 : index
    %4 = vector.load %arg11[%c0_2, %c0_3, %c0_4] : memref<4x8x128xbf16, #tpu.memory_space<vmem>>, vector<4x8x128xbf16>
    %5 = vector.shape_cast %3 : vector<16x8xbf16> to vector<1x16x8xbf16>
    %6 = vector.shape_cast %5 : vector<1x16x8xbf16> to vector<1x16x8xbf16>
    %7 = vector.broadcast %6 : vector<1x16x8xbf16> to vector<4x16x8xbf16>
    %cst = arith.constant dense<0.000000e+00> : vector<4x16x128xf32>
    %8 = tpu.matmul %7, %4, %cst {dimension_numbers = #tpu.dot_dimension_numbers<[2], [1], [1], [2], [0, 0, 0, 1, 1, 2], [0], [0]>} : vector<4x16x8xbf16>, vector<4x8x128xbf16>, vector<4x16x128xf32> -> vector<4x16x128xf32>
    %c0_5 = arith.constant 0 : index
    %c0_6 = arith.constant 0 : index
    %c0_7 = arith.constant 0 : index
    %9 = vector.load %arg5[%c0_5, %c0_6, %c0_7] : memref<1x16x128xi32, #tpu.memory_space<vmem>>, vector<1x16x128xi32>
    %10 = vector.shape_cast %9 : vector<1x16x128xi32> to vector<16x128xi32>
    %c255_i32 = arith.constant 255 : i32
    %11 = vector.broadcast %c255_i32 : i32 to vector<16x128xi32>
    %12 = arith.cmpi ne, %10, %11 : vector<16x128xi32>
    %13 = arith.extui %12 : vector<16x128xi1> to vector<16x128xi32>
    %14 = arith.sitofp %13 : vector<16x128xi32> to vector<16x128xf32>
    %cst_8 = arith.constant dense<0xFF800000> : vector<16x128xf32>
    %15 = vector.multi_reduction <maximumf>, %8, %cst_8 [0] : vector<4x16x128xf32> to vector<16x128xf32>
    %16 = vector.shape_cast %15 : vector<16x128xf32> to vector<1x16x128xf32>
    %17 = vector.broadcast %16 : vector<1x16x128xf32> to vector<4x16x128xf32>
    %18 = arith.subf %8, %17 : vector<4x16x128xf32>
    %19 = math.exp %18 : vector<4x16x128xf32>
    %cst_9 = arith.constant dense<0.000000e+00> : vector<16x128xf32>
    %20 = vector.multi_reduction <add>, %19, %cst_9 [0] : vector<4x16x128xf32> to vector<16x128xf32>
    %21 = math.log %20 : vector<16x128xf32>
    %22 = arith.addf %21, %15 : vector<16x128xf32>
    %23 = tpu.iota {dimensions = array<i32: 0>} : vector<4x16x128xi32>
    %24 = vector.shape_cast %10 : vector<16x128xi32> to vector<1x16x128xi32>
    %25 = vector.broadcast %24 : vector<1x16x128xi32> to vector<4x16x128xi32>
    %26 = arith.cmpi eq, %23, %25 : vector<4x16x128xi32>
    %27 = arith.extui %26 : vector<4x16x128xi1> to vector<4x16x128xi32>
    %28 = arith.sitofp %27 : vector<4x16x128xi32> to vector<4x16x128xf32>
    %29 = arith.mulf %28, %8 : vector<4x16x128xf32>
    %cst_10 = arith.constant dense<0.000000e+00> : vector<16x128xf32>
    %30 = vector.multi_reduction <add>, %29, %cst_10 [0] : vector<4x16x128xf32> to vector<16x128xf32>
    %c0_11 = arith.constant 0 : index
    %c0_12 = arith.constant 0 : index
    %31 = vector.load %arg12[%c0_11, %c0_12] : memref<1x1xf32, #tpu.memory_space<vmem>>, vector<1x1xf32>
    %32 = arith.subf %22, %30 : vector<16x128xf32>
    %33 = arith.mulf %14, %32 : vector<16x128xf32>
    %34 = vector.shape_cast %33 : vector<16x128xf32> to vector<1x16x128xf32>
    %cst_13 = arith.constant dense<0.000000e+00> : vector<1xf32>
    %35 = vector.multi_reduction <add>, %34, %cst_13 [1, 2] : vector<1x16x128xf32> to vector<1xf32>
    %36 = vector.shape_cast %35 : vector<1xf32> to vector<1x1x1xf32>
    %37 = vector.extract %36[0, 0, 0] : f32 from vector<1x1x1xf32>
    %38 = vector.broadcast %37 : f32 to vector<1x1xf32>
    %39 = arith.addf %31, %38 : vector<1x1xf32>
    %c0_14 = arith.constant 0 : index
    %c0_15 = arith.constant 0 : index
    %40 = vector.load %arg12[%c0_14, %c0_15] : memref<1x1xf32, #tpu.memory_space<vmem>>, vector<1x1xf32>
    tpu.vector_store %arg12[%c0_14, %c0_15], %39 {strides = array<i32>} : memref<1x1xf32, #tpu.memory_space<vmem>>, vector<1x1xf32>,
    %c0_16 = arith.constant 0 : index
    %c0_17 = arith.constant 0 : index
    %41 = vector.load %arg13[%c0_16, %c0_17] : memref<1x1xf32, #tpu.memory_space<vmem>>, vector<1x1xf32>
    %42 = vector.shape_cast %14 : vector<16x128xf32> to vector<1x16x128xf32>
    %cst_18 = arith.constant dense<0.000000e+00> : vector<1xf32>
    %43 = vector.multi_reduction <add>, %42, %cst_18 [1, 2] : vector<1x16x128xf32> to vector<1xf32>
    %44 = vector.shape_cast %43 : vector<1xf32> to vector<1x1x1xf32>
    %45 = vector.extract %44[0, 0, 0] : f32 from vector<1x1x1xf32>
    %46 = vector.broadcast %45 : f32 to vector<1x1xf32>
    %47 = arith.addf %41, %46 : vector<1x1xf32>
    %c0_19 = arith.constant 0 : index
    %c0_20 = arith.constant 0 : index
    %48 = vector.load %arg13[%c0_19, %c0_20] : memref<1x1xf32, #tpu.memory_space<vmem>>, vector<1x1xf32>
    tpu.vector_store %arg13[%c0_19, %c0_20], %47 {strides = array<i32>} : memref<1x1xf32, #tpu.memory_space<vmem>>, vector<1x1xf32>,
    %49 = tpu.reciprocal %20 {approx = true} : vector<16x128xf32> -> vector<16x128xf32>
    %50 = vector.shape_cast %49 : vector<16x128xf32> to vector<1x16x128xf32>
    %51 = vector.broadcast %50 : vector<1x16x128xf32> to vector<4x16x128xf32>
    %52 = arith.mulf %19, %51 : vector<4x16x128xf32>
    %53 = vector.shape_cast %14 : vector<16x128xf32> to vector<1x16x128xf32>
    %54 = vector.broadcast %53 : vector<1x16x128xf32> to vector<4x16x128xf32>
    %55 = arith.mulf %28, %54 : vector<4x16x128xf32>
    %56 = arith.subf %28, %52 : vector<4x16x128xf32>
    %57 = math.absf %56 : vector<4x16x128xf32>
    %58 = vector.shape_cast %14 : vector<16x128xf32> to vector<1x16x128xf32>
    %59 = vector.broadcast %58 : vector<1x16x128xf32> to vector<4x16x128xf32>
    %60 = arith.mulf %57, %59 : vector<4x16x128xf32>
    %cst_21 = arith.constant 0.000000e+00 : f32
    %61 = vector.broadcast %cst_21 : f32 to vector<4x16x128xf32>
    %62 = arith.subf %61, %60 : vector<4x16x128xf32>
    %63 = arith.truncf %62 : vector<4x16x128xf32> to vector<4x16x128xbf16>
    %c0_22 = arith.constant 0 : index
    %c0_23 = arith.constant 0 : index
    %c0_24 = arith.constant 0 : index
    %c0_25 = arith.constant 0 : index
    %64 = vector.load %arg6[%c0_22, %c0_23, %c0_24, %c0_25] : memref<4x1x16x128xbf16, #tpu.memory_space<vmem>>, vector<4x1x16x128xbf16>
    %65 = vector.shape_cast %64 : vector<4x1x16x128xbf16> to vector<4x16x128xbf16>
    %66 = vector.shape_cast %63 : vector<4x16x128xbf16> to vector<4x1x16x128xbf16>
    tpu.vector_store %arg6[%c0_22, %c0_23, %c0_24, %c0_25], %66 {strides = array<i32>} : memref<4x1x16x128xbf16, #tpu.memory_space<vmem>>, vector<4x1x16x128xbf16>,
    %67 = arith.truncf %55 : vector<4x16x128xf32> to vector<4x16x128xbf16>
    %c0_26 = arith.constant 0 : index
    %c0_27 = arith.constant 0 : index
    %c0_28 = arith.constant 0 : index
    %c0_29 = arith.constant 0 : index
    %68 = vector.load %arg7[%c0_26, %c0_27, %c0_28, %c0_29] : memref<4x1x16x128xbf16, #tpu.memory_space<vmem>>, vector<4x1x16x128xbf16>
    %69 = vector.shape_cast %68 : vector<4x1x16x128xbf16> to vector<4x16x128xbf16>
    %70 = vector.shape_cast %67 : vector<4x16x128xbf16> to vector<4x1x16x128xbf16>
    tpu.vector_store %arg7[%c0_26, %c0_27, %c0_28, %c0_29], %70 {strides = array<i32>} : memref<4x1x16x128xbf16, #tpu.memory_space<vmem>>, vector<4x1x16x128xbf16>,
    %c0_30 = arith.constant 0 : index
    %c0_31 = arith.constant 0 : index
    %71 = vector.load %arg14[%c0_30, %c0_31] : memref<4x1xf32, #tpu.memory_space<vmem>>, vector<4x1xf32>
    %cst_32 = arith.constant dense<0.000000e+00> : vector<4x16xf32>
    %72 = vector.multi_reduction <add>, %55, %cst_32 [2] : vector<4x16x128xf32> to vector<4x16xf32>
    %cst_33 = arith.constant dense<0.000000e+00> : vector<4xf32>
    %73 = vector.multi_reduction <add>, %72, %cst_33 [1] : vector<4x16xf32> to vector<4xf32>
    %74 = vector.shape_cast %73 : vector<4xf32> to vector<4x1xf32>
    %75 = arith.addf %71, %74 : vector<4x1xf32>
    %c0_34 = arith.constant 0 : index
    %c0_35 = arith.constant 0 : index
    %76 = vector.load %arg14[%c0_34, %c0_35] : memref<4x1xf32, #tpu.memory_space<vmem>>, vector<4x1xf32>
    tpu.vector_store %arg14[%c0_34, %c0_35], %75 {strides = array<i32>} : memref<4x1xf32, #tpu.memory_space<vmem>>, vector<4x1xf32>,
    %c0_i32_36 = arith.constant 0 : i32
    %77 = arith.cmpi eq, %arg1, %c0_i32_36 : i32
    %78 = arith.extui %77 : i1 to i32
    %c0_i32_37 = arith.constant 0 : i32
    %79 = arith.cmpi ne, %78, %c0_i32_37 : i32
    scf.if %79 {
      %c0_38 = arith.constant 0 : index
      %c0_39 = arith.constant 0 : index
      %80 = vector.load %arg12[%c0_38, %c0_39] : memref<1x1xf32, #tpu.memory_space<vmem>>, vector<1x1xf32>
      %81 = vector.shape_cast %80 : vector<1x1xf32> to vector<1x1xf32>
      %82 = vector.broadcast %81 : vector<1x1xf32> to vector<1x128xf32>
      %c0_40 = arith.constant 0 : index
      %c0_41 = arith.constant 0 : index
      %83 = vector.load %arg8[%c0_40, %c0_41] : memref<1x128xf32, #tpu.memory_space<vmem>>, vector<1x128xf32>
      tpu.vector_store %arg8[%c0_40, %c0_41], %82 {strides = array<i32>} : memref<1x128xf32, #tpu.memory_space<vmem>>, vector<1x128xf32>,
      %c0_42 = arith.constant 0 : index
      %c0_43 = arith.constant 0 : index
      %84 = vector.load %arg13[%c0_42, %c0_43] : memref<1x1xf32, #tpu.memory_space<vmem>>, vector<1x1xf32>
      %85 = vector.shape_cast %84 : vector<1x1xf32> to vector<1x1xf32>
      %86 = vector.broadcast %85 : vector<1x1xf32> to vector<1x128xf32>
      %c0_44 = arith.constant 0 : index
      %c0_45 = arith.constant 0 : index
      %87 = vector.load %arg9[%c0_44, %c0_45] : memref<1x128xf32, #tpu.memory_space<vmem>>, vector<1x128xf32>
      tpu.vector_store %arg9[%c0_44, %c0_45], %86 {strides = array<i32>} : memref<1x128xf32, #tpu.memory_space<vmem>>, vector<1x128xf32>,
      %c0_46 = arith.constant 0 : index
      %c0_47 = arith.constant 0 : index
      %88 = vector.load %arg14[%c0_46, %c0_47] : memref<4x1xf32, #tpu.memory_space<vmem>>, vector<4x1xf32>
      %89 = vector.shape_cast %88 : vector<4x1xf32> to vector<4x1xf32>
      %90 = vector.broadcast %89 : vector<4x1xf32> to vector<4x128xf32>
      %c0_48 = arith.constant 0 : index
      %c0_49 = arith.constant 0 : index
      %91 = vector.load %arg10[%c0_48, %c0_49] : memref<4x128xf32, #tpu.memory_space<vmem>>, vector<4x128xf32>
      tpu.vector_store %arg10[%c0_48, %c0_49], %90 {strides = array<i32>} : memref<4x128xf32, #tpu.memory_space<vmem>>, vector<4x128xf32>,
    } else {
    }
    return
  }
  func.func @transform_0(%arg0: i32, %arg1: i32) -> (i32, i32, i32, i32) {
    %c0_i32 = arith.constant 0 : i32
    %c0_i32_0 = arith.constant 0 : i32
    %c0_i32_1 = arith.constant 0 : i32
    %c0_i32_2 = arith.constant 0 : i32
    return %arg0, %c0_i32, %c0_i32_0, %c0_i32_1 : i32, i32, i32, i32
  }
  func.func @transform_1(%arg0: i32, %arg1: i32) -> (i32, i32) {
    %c0_i32 = arith.constant 0 : i32
    %c0_i32_0 = arith.constant 0 : i32
    return %arg1, %c0_i32 : i32, i32
  }
  func.func @transform_2(%arg0: i32, %arg1: i32) -> (i32, i32) {
    %c0_i32 = arith.constant 0 : i32
    %c0_i32_0 = arith.constant 0 : i32
    %c0_i32_1 = arith.constant 0 : i32
    return %c0_i32, %c0_i32_0 : i32, i32
  }
  func.func @transform_3(%arg0: i32, %arg1: i32) -> (i32, i32, i32) {
    %c0_i32 = arith.constant 0 : i32
    %c0_i32_0 = arith.constant 0 : i32
    return %arg0, %arg1, %c0_i32 : i32, i32, i32
  }
  func.func @transform_4(%arg0: i32, %arg1: i32) -> (i32, i32, i32, i32) {
    %c0_i32 = arith.constant 0 : i32
    %c0_i32_0 = arith.constant 0 : i32
    %c0_i32_1 = arith.constant 0 : i32
    return %c0_i32, %arg0, %arg1, %c0_i32_0 : i32, i32, i32, i32
  }
  func.func @transform_5(%arg0: i32, %arg1: i32) -> (i32, i32, i32, i32) {
    %c0_i32 = arith.constant 0 : i32
    %c0_i32_0 = arith.constant 0 : i32
    %c0_i32_1 = arith.constant 0 : i32
    return %c0_i32, %arg0, %arg1, %c0_i32_0 : i32, i32, i32, i32
  }
  func.func @transform_6(%arg0: i32, %arg1: i32) -> (i32, i32) {
    %c0_i32 = arith.constant 0 : i32
    %c0_i32_0 = arith.constant 0 : i32
    return %c0_i32, %arg0 : i32, i32
  }
  func.func @transform_7(%arg0: i32, %arg1: i32) -> (i32, i32) {
    %c0_i32 = arith.constant 0 : i32
    %c0_i32_0 = arith.constant 0 : i32
    return %c0_i32, %arg0 : i32, i32
  }
  func.func @transform_8(%arg0: i32, %arg1: i32) -> (i32, i32) {
    %c0_i32 = arith.constant 0 : i32
    %c0_i32_0 = arith.constant 0 : i32
    return %c0_i32, %arg0 : i32, i32
  }
}

</mosaic_0001>

<llo_original>
// kernel: tpu_custom_call.1
$region0: #{tpu_custom_call.1}
  #allocation0 [shape = 'u32[]', space=smem, size = 0x4, offset = 0x4, fixed_abs, tag = 'smem constant byte address 0x4 - core index']
  #allocation1 [shape = 'u32[144,128]{1,0:T(1,128)}', space=vmem, size = 0x12000, scoped, tag = 'internal scratch']
  #allocation2 [shape = 'bf16[4,8,128]{2,1,0:T(8,128)(2,1)}', space=vmem, size = 0x2000, scoped, tag = 'scratch operand']
  #allocation3 [shape = 'f32[1,1]{1,0:T(1,128)}', space=vmem, size = 0x200, scoped, tag = 'scratch operand']
  #allocation4 [shape = 'f32[1,1]{1,0:T(1,128)}', space=vmem, size = 0x200, scoped, tag = 'scratch operand']
  #allocation5 [shape = 'f32[4,1]{1,0:T(4,128)}', space=vmem, size = 0x800, scoped, tag = 'scratch operand']
  #allocation18 [shape = 's32[]', space=sflag, size = 0x4, offset = 0, fixed_abs, tag = 'sflag constant byte address 0x0 - dummy sync flag']
  #allocation20 [shape = 's32[]', space=sflag, size = 0x4, offset = 0, fixed_abs, tag = 'sflag constant byte address 0x0 - dummy sync flag']
  %s0 = inlined_call_operand.hbm [shape: bf16[2,4,8,8], index: 0, kind: input, shape index: {}]
  %s1 = inlined_call_operand.vmem [shape: bf16[16,8], index: 1, kind: input, shape index: {}]
  %s2 = inlined_call_operand.vmem [shape: bf16[8,128], index: 2, kind: input, shape index: {}]
  %s3 = inlined_call_operand.hbm [shape: s32[2,16,128], index: 3, kind: input, shape index: {}]
  %s4 = inlined_call_operand.hbm [shape: bf16[4,2,16,128], index: 4, kind: output, shape index: {0}]
  %s5 = inlined_call_operand.hbm [shape: bf16[4,2,16,128], index: 5, kind: output, shape index: {1}]
  %s6 = inlined_call_operand.hbm [shape: f32[1,256], index: 6, kind: output, shape index: {2}]
  %s7 = inlined_call_operand.hbm [shape: f32[1,256], index: 7, kind: output, shape index: {3}]
  %s8 = inlined_call_operand.hbm [shape: f32[4,256], index: 8, kind: output, shape index: {4}]
  %9 = xla_tuple %s4, %s5, %s6, %s7, %s8
  %s10 = sld [smem:[#allocation0]]
  $region97: #{tpu_custom_call.1} parent=0
    _
  %s12 = ssub.s32 1, %s10
  %s13 = scalar_select 0, %s12, %s10
  $region1: #{tpu_custom_call.1} parent=0
    #allocation6 [shape = 'u8[16384]{0}', space=vmem, size = 0x4000, scoped, tag = 'input window, operand 0']
    #allocation7 [shape = 's32[2]{0}', space=sflag, size = 0x8, scoped, tag = 'scoped memory for tpu_custom_call.1']
    #allocation8 [shape = 's32[2]{0}', space=sflag, size = 0x8, scoped, tag = 'scoped memory for tpu_custom_call.1']
    #allocation9 [shape = 'u8[16384]{0}', space=vmem, size = 0x4000, scoped, tag = 'input window, operand 3']
    #allocation10 [shape = 's32[2]{0}', space=sflag, size = 0x8, scoped, tag = 'scoped memory for tpu_custom_call.1']
    #allocation11 [shape = 'u8[32768]{0}', space=vmem, size = 0x8000, scoped, tag = 'output window, operand 0']
    #allocation12 [shape = 'u8[32768]{0}', space=vmem, size = 0x8000, scoped, tag = 'output window, operand 1']
    #allocation13 [shape = 's32[2]{0}', space=sflag, size = 0x8, scoped, tag = 'scoped memory for tpu_custom_call.1']
    #allocation14 [shape = 'u8[1024]{0}', space=vmem, size = 0x400, scoped, tag = 'output window, operand 2']
    #allocation15 [shape = 'u8[1024]{0}', space=vmem, size = 0x400, scoped, tag = 'output window, operand 3']
    #allocation16 [shape = 's32[2]{0}', space=sflag, size = 0x8, scoped, tag = 'scoped memory for tpu_custom_call.1']
    #allocation17 [shape = 'u8[4096]{0}', space=vmem, size = 0x1000, scoped, tag = 'output window, operand 4']
    %14 = vsyncpa [#allocation7], 0
    %s15 = scalar_lea.sflag [#allocation7], 1
    %16 = vsyncpa %s15, 0
    %17 = vsyncpa [#allocation10], 0
    %s18 = scalar_lea.sflag [#allocation10], 1
    %19 = vsyncpa %s18, 0
    %20 = vsyncpa [#allocation8], 0
    %s21 = scalar_lea.sflag [#allocation8], 1
    %22 = vsyncpa %s21, 0
    %23 = vsyncpa [#allocation13], 0
    %s24 = scalar_lea.sflag [#allocation13], 1
    %25 = vsyncpa %s24, 0
    %26 = vsyncpa [#allocation16], 0
    %s27 = scalar_lea.sflag [#allocation16], 1
    %28 = vsyncpa %s27, 0
    loop: start=0, step=1, limit=4
    $region2: #{tpu_custom_call.1} parent=1 // loop_pre_header
      _
    $region3: #{tpu_custom_call.1} parent=1 // loop_header
      %s30 = sphi 0, %s34
      %p31 = scmp.ge.s32.totalorder %s30, 4
      %s37 = sphi 0, %s49
      %s38 = sphi 0, %s45
      %s39 = sphi 0, %s37
      %s40 = sphi 0, %s38
      %s41 = sphi 0, %s39
      %s42 = sphi 0, %s40
      %s52 = sphi 0, %s54
      %s55 = sphi 0, %s52
      %s56 = sphi 0, %s55
      %s72 = sphi 0, %s56
      %s78 = sphi 0, %s80
      %s81 = sphi 0, %s78
      %s82 = sphi 0, %s81
      %s98 = sphi 0, %s82
      %s102 = sphi 0, %s102
      %s104 = sphi 0, %s102
      %s105 = sphi 0, %s104
      %s119 = sphi 0, %s105
      %s127 = sphi 0, %s129
      %s130 = sphi 0, %s127
      %s131 = sphi 0, %s130
      %s147 = sphi 0, %s131
      %s155 = sphi 0, %s157
      %s158 = sphi 0, %s155
      %s159 = sphi 0, %s158
      %s175 = sphi 0, %s159
      %s183 = sphi 0, %s185
      %s186 = sphi 0, %s183
      %s187 = sphi 0, %s186
      %s203 = sphi 0, %s187
      %s209 = sphi 0, %s211
      %s212 = sphi 0, %s209
      %s213 = sphi 0, %s212
      %s229 = sphi 0, %s213
      %s235 = sphi 0, %s237
      %s238 = sphi 0, %s235
      %s239 = sphi 0, %s238
      %s255 = sphi 0, %s239
      %s261 = sphi 0, %s263
      %s264 = sphi 0, %s261
      %s265 = sphi 0, %s264
      %s281 = sphi 0, %s265
    $region4: #{tpu_custom_call.1} parent=1 // loop_header_branch
      %33 = sbr.rel (%p31) target = $region8
    $region5: #{tpu_custom_call.1} parent=1 // loop_body
      %s35 = ssub.s32 %s30, 1
      %s36 = ssub.s32 %s30, 2
      %s43 = sadd.s32 1, %s38
      %p44 = scmp.ge.s32.totalorder %s43, 1
      %s45 = scalar_select %p44, 0, %s43
      %s46 = sadd.s32 1, %s37
      %s47 = scalar_select %p44, %s46, %s37
      %p48 = scmp.ge.s32.totalorder %s47, 2
      %s49 = scalar_select %p48, 0, %s47
      %s50 = ssub.s32 %s37, %s49
      %p51 = scmp.eq.s32.totalorder %s50, 0
      %s53 = sadd.s32 %s52, 1
      %s54 = scalar_select %p51, %s52, %s53
      %p57 = pneg %p51
      %p58 = scmp.eq.s32.totalorder %s30, 1
      %p59 = por %p57, %p58
      %p60 = scmp.ne.s32.totalorder %s52, %s55
      %p61 = scmp.eq.s32.totalorder %s30, 0
      %p62 = por %p60, %p61
      %p63 = scmp.ne.s32.totalorder %s52, %s55
      %p64 = scmp.eq.s32.totalorder %s35, 1
      %p65 = por %p63, %p64
      %p66 = scmp.ne.s32.totalorder %s55, %s56
      %p67 = scmp.eq.s32.totalorder %s35, 0
      %p68 = por %p66, %p67
      %p69 = scmp.ne.s32.totalorder %s55, %s56
      %p70 = scmp.eq.s32.totalorder %s36, 1
      %p71 = por %p69, %p70
      %p73 = scmp.ne.s32.totalorder %s56, %s72
      %p74 = scmp.eq.s32.totalorder %s36, 0
      %p75 = por %p73, %p74
      %s76 = ssub.s32 %s38, %s45
      %p77 = scmp.eq.s32.totalorder %s76, 0
      %s79 = sadd.s32 %s78, 1
      %s80 = scalar_select %p77, %s78, %s79
      %p83 = pneg %p77
      %p84 = scmp.eq.s32.totalorder %s30, 1
      %p85 = por %p83, %p84
      %p86 = scmp.ne.s32.totalorder %s78, %s81
      %p87 = scmp.eq.s32.totalorder %s30, 0
      %p88 = por %p86, %p87
      %p89 = scmp.ne.s32.totalorder %s78, %s81
      %p90 = scmp.eq.s32.totalorder %s35, 1
      %p91 = por %p89, %p90
      %p92 = scmp.ne.s32.totalorder %s81, %s82
      %p93 = scmp.eq.s32.totalorder %s35, 0
      %p94 = por %p92, %p93
      %p95 = scmp.ne.s32.totalorder %s81, %s82
      %p96 = scmp.eq.s32.totalorder %s36, 1
      %p97 = por %p95, %p96
      %p99 = scmp.ne.s32.totalorder %s82, %s98
      %p100 = scmp.eq.s32.totalorder %s36, 0
      %p101 = por %p99, %p100
      %s103 = sadd.s32 %s102, 1
      %p106 = scmp.eq.s32.totalorder %s30, 1
      %p107 = scmp.ne.s32.totalorder %s102, %s104
      %p108 = scmp.eq.s32.totalorder %s30, 0
      %p109 = por %p107, %p108
      %p110 = scmp.ne.s32.totalorder %s102, %s104
      %p111 = scmp.eq.s32.totalorder %s35, 1
      %p112 = por %p110, %p111
      %p113 = scmp.ne.s32.totalorder %s104, %s105
      %p114 = scmp.eq.s32.totalorder %s35, 0
      %p115 = por %p113, %p114
      %p116 = scmp.ne.s32.totalorder %s104, %s105
      %p117 = scmp.eq.s32.totalorder %s36, 1
      %p118 = por %p116, %p117
      %p120 = scmp.ne.s32.totalorder %s105, %s119
      %p121 = scmp.eq.s32.totalorder %s36, 0
      %p122 = por %p120, %p121
      %s123 = ssub.s32 %s37, %s49
      %s124 = ssub.s32 %s38, %s45
      %s125 = sor.u32 %s123, %s124
      %p126 = scmp.eq.s32.totalorder %s125, 0
      %s128 = sadd.s32 %s127, 1
      %s129 = scalar_select %p126, %s127, %s128
      %p132 = pneg %p126
      %p133 = scmp.eq.s32.totalorder %s30, 1
      %p134 = por %p132, %p133
      %p135 = scmp.ne.s32.totalorder %s127, %s130
      %p136 = scmp.eq.s32.totalorder %s30, 0
      %p137 = por %p135, %p136
      %p138 = scmp.ne.s32.totalorder %s127, %s130
      %p139 = scmp.eq.s32.totalorder %s35, 1
      %p140 = por %p138, %p139
      %p141 = scmp.ne.s32.totalorder %s130, %s131
      %p142 = scmp.eq.s32.totalorder %s35, 0
      %p143 = por %p141, %p142
      %p144 = scmp.ne.s32.totalorder %s130, %s131
      %p145 = scmp.eq.s32.totalorder %s36, 1
      %p146 = por %p144, %p145
      %p148 = scmp.ne.s32.totalorder %s131, %s147
      %p149 = scmp.eq.s32.totalorder %s36, 0
      %p150 = por %p148, %p149
      %s151 = ssub.s32 %s37, %s49
      %s152 = ssub.s32 %s38, %s45
      %s153 = sor.u32 %s151, %s152
      %p154 = scmp.eq.s32.totalorder %s153, 0
      %s156 = sadd.s32 %s155, 1
      %s157 = scalar_select %p154, %s155, %s156
      %p160 = pneg %p154
      %p161 = scmp.eq.s32.totalorder %s30, 1
      %p162 = por %p160, %p161
      %p163 = scmp.ne.s32.totalorder %s155, %s158
      %p164 = scmp.eq.s32.totalorder %s30, 0
      %p165 = por %p163, %p164
      %p166 = scmp.ne.s32.totalorder %s155, %s158
      %p167 = scmp.eq.s32.totalorder %s35, 1
      %p168 = por %p166, %p167
      %p169 = scmp.ne.s32.totalorder %s158, %s159
      %p170 = scmp.eq.s32.totalorder %s35, 0
      %p171 = por %p169, %p170
      %p172 = scmp.ne.s32.totalorder %s158, %s159
      %p173 = scmp.eq.s32.totalorder %s36, 1
      %p174 = por %p172, %p173
      %p176 = scmp.ne.s32.totalorder %s159, %s175
      %p177 = scmp.eq.s32.totalorder %s36, 0
      %p178 = por %p176, %p177
      %s179 = ssub.s32 %s37, %s49
      %s180 = ssub.s32 %s38, %s45
      %s181 = sor.u32 %s179, %s180
      %p182 = scmp.eq.s32.totalorder %s181, 0
      %s184 = sadd.s32 %s183, 1
      %s185 = scalar_select %p182, %s183, %s184
      %p188 = pneg %p182
      %p189 = scmp.eq.s32.totalorder %s30, 1
      %p190 = por %p188, %p189
      %p191 = scmp.ne.s32.totalorder %s183, %s186
      %p192 = scmp.eq.s32.totalorder %s30, 0
      %p193 = por %p191, %p192
      %p194 = scmp.ne.s32.totalorder %s183, %s186
      %p195 = scmp.eq.s32.totalorder %s35, 1
      %p196 = por %p194, %p195
      %p197 = scmp.ne.s32.totalorder %s186, %s187
      %p198 = scmp.eq.s32.totalorder %s35, 0
      %p199 = por %p197, %p198
      %p200 = scmp.ne.s32.totalorder %s186, %s187
      %p201 = scmp.eq.s32.totalorder %s36, 1
      %p202 = por %p200, %p201
      %p204 = scmp.ne.s32.totalorder %s187, %s203
      %p205 = scmp.eq.s32.totalorder %s36, 0
      %p206 = por %p204, %p205
      %s207 = ssub.s32 %s37, %s49
      %p208 = scmp.eq.s32.totalorder %s207, 0
      %s210 = sadd.s32 %s209, 1
      %s211 = scalar_select %p208, %s209, %s210
      %p214 = pneg %p208
      %p215 = scmp.eq.s32.totalorder %s30, 1
      %p216 = por %p214, %p215
      %p217 = scmp.ne.s32.totalorder %s209, %s212
      %p218 = scmp.eq.s32.totalorder %s30, 0
      %p219 = por %p217, %p218
      %p220 = scmp.ne.s32.totalorder %s209, %s212
      %p221 = scmp.eq.s32.totalorder %s35, 1
      %p222 = por %p220, %p221
      %p223 = scmp.ne.s32.totalorder %s212, %s213
      %p224 = scmp.eq.s32.totalorder %s35, 0
      %p225 = por %p223, %p224
      %p226 = scmp.ne.s32.totalorder %s212, %s213
      %p227 = scmp.eq.s32.totalorder %s36, 1
      %p228 = por %p226, %p227
      %p230 = scmp.ne.s32.totalorder %s213, %s229
      %p231 = scmp.eq.s32.totalorder %s36, 0
      %p232 = por %p230, %p231
      %s233 = ssub.s32 %s37, %s49
      %p234 = scmp.eq.s32.totalorder %s233, 0
      %s236 = sadd.s32 %s235, 1
      %s237 = scalar_select %p234, %s235, %s236
      %p240 = pneg %p234
      %p241 = scmp.eq.s32.totalorder %s30, 1
      %p242 = por %p240, %p241
      %p243 = scmp.ne.s32.totalorder %s235, %s238
      %p244 = scmp.eq.s32.totalorder %s30, 0
      %p245 = por %p243, %p244
      %p246 = scmp.ne.s32.totalorder %s235, %s238
      %p247 = scmp.eq.s32.totalorder %s35, 1
      %p248 = por %p246, %p247
      %p249 = scmp.ne.s32.totalorder %s238, %s239
      %p250 = scmp.eq.s32.totalorder %s35, 0
      %p251 = por %p249, %p250
      %p252 = scmp.ne.s32.totalorder %s238, %s239
      %p253 = scmp.eq.s32.totalorder %s36, 1
      %p254 = por %p252, %p253
      %p256 = scmp.ne.s32.totalorder %s239, %s255
      %p257 = scmp.eq.s32.totalorder %s36, 0
      %p258 = por %p256, %p257
      %s259 = ssub.s32 %s37, %s49
      %p260 = scmp.eq.s32.totalorder %s259, 0
      %s262 = sadd.s32 %s261, 1
      %s263 = scalar_select %p260, %s261, %s262
      %p266 = pneg %p260
      %p267 = scmp.eq.s32.totalorder %s30, 1
      %p268 = por %p266, %p267
      %p269 = scmp.ne.s32.totalorder %s261, %s264
      %p270 = scmp.eq.s32.totalorder %s30, 0
      %p271 = por %p269, %p270
      %p272 = scmp.ne.s32.totalorder %s261, %s264
      %p273 = scmp.eq.s32.totalorder %s35, 1
      %p274 = por %p272, %p273
      %p275 = scmp.ne.s32.totalorder %s264, %s265
      %p276 = scmp.eq.s32.totalorder %s35, 0
      %p277 = por %p275, %p276
      %p278 = scmp.ne.s32.totalorder %s264, %s265
      %p279 = scmp.eq.s32.totalorder %s36, 1
      %p280 = por %p278, %p279
      %p282 = scmp.ne.s32.totalorder %s265, %s281
      %p283 = scmp.eq.s32.totalorder %s36, 0
      %p284 = por %p282, %p283
      %p285 = scmp.le.s32.totalorder 1, %s30
      %p286 = scmp.lt.s32.totalorder %s30, 3
      %p287 = pnand %p285, %p286
      %p288 = pneg %p287
      // Predicated region
      $region9: #{tpu_custom_call.1} parent=5 // pred_check
        _
      $region10: #{tpu_custom_call.1} parent=5 // pred_check_branch
        %290 = sbr.rel (%p287) target = $region12
      $region11: #{tpu_custom_call.1} parent=5 // pred_region
        %s291 = ssub.s32 %s30, 1
        // Predicated region
        $region13: #{tpu_custom_call.1} parent=11 // pred_check
          %p292 = pneg %p94
        $region14: #{tpu_custom_call.1} parent=11 // pred_check_branch
          %294 = sbr.rel (%p292) target = $region16
        $region15: #{tpu_custom_call.1} parent=11 // pred_region
          %s295 = smul.u32 2, %s40
          %p296 = scmp.lt.s32.totalorder %s295, 1
          %s297 = scalar_select %p296, %s295, 1
          %s298 = smul.addr %s297, 4
          %s299 = scalar_lea.vmem %s1, %s298
          %s300 = smul.u32 2, %s40
        $region16: #{tpu_custom_call.1} parent=11 // pred_fallthru
          _
        // Predicated region
        $region17: #{tpu_custom_call.1} parent=11 // pred_check
          %p301 = pneg %p115
        $region18: #{tpu_custom_call.1} parent=11 // pred_check_branch
          %303 = sbr.rel (%p301) target = $region20
        $region19: #{tpu_custom_call.1} parent=11 // pred_region
          _
        $region20: #{tpu_custom_call.1} parent=11 // pred_fallthru
          _
      $region12: #{tpu_custom_call.1} parent=5 // pred_fallthru
        _
      %p304 = scmp.lt.s32.totalorder %s30, 2
      // Predicated region
      $region21: #{tpu_custom_call.1} parent=5 // pred_check
        %p305 = pneg %p304
      $region22: #{tpu_custom_call.1} parent=5 // pred_check_branch
        %307 = sbr.rel (%p305) target = $region24
      $region23: #{tpu_custom_call.1} parent=5 // pred_region
        // Predicated region
        $region25: #{tpu_custom_call.1} parent=23 // pred_check
          %p308 = pneg %p62
        $region26: #{tpu_custom_call.1} parent=23 // pred_check_branch
          %310 = sbr.rel (%p308) target = $region28
        $region27: #{tpu_custom_call.1} parent=23 // pred_region
          %s311 = sand.u32 %s52, 1
          %s312 = scalar_lea.sflag [#allocation7], %s311
          %s313 = sand.u32 %s52, 1
          %s314 = smul.addr %s313, 16
          %s315 = scalar_lea.vmem [#allocation6], %s314
          %s317 = ssub.s32 256, 256
          %318 = vsyncadd %s312, %s317
          %s319 = smul.addr %s37, 4
          %s320 = smul.addr %s319, 64
          %s321 = scalar_lea.hbm %s0, %s320
          %s322 = sshll.u32 %s315, 4
          %s323 = int_to_ptr.vmem [resolvable:$true] %s322
          %328 = dma.hbm_to_vmem [thread:$0]  %s321, 256, %s323, %s312, 64, 64, 4
        $region28: #{tpu_custom_call.1} parent=23 // pred_fallthru
          _
        // Predicated region
        $region29: #{tpu_custom_call.1} parent=23 // pred_check
          %p329 = pneg %p137
        $region30: #{tpu_custom_call.1} parent=23 // pred_check_branch
          %331 = sbr.rel (%p329) target = $region32
        $region31: #{tpu_custom_call.1} parent=23 // pred_region
          %s332 = sand.u32 %s127, 1
          %s333 = scalar_lea.sflag [#allocation10], %s332
          %s334 = sand.u32 %s127, 1
          %s335 = smul.addr %s334, 16
          %s336 = scalar_lea.vmem [#allocation9], %s335
          %s337 = smul.u32 2, %s38
          %s339 = ssub.s32 256, 256
          %340 = vsyncadd %s333, %s339
          %s341 = smul.addr %s37, 2
          %s342 = sadd.s32 %s337, %s341
          %s343 = smul.addr %s342, 128
          %s344 = scalar_lea.hbm %s3, %s343
          %s345 = sshll.u32 %s336, 4
          %s346 = int_to_ptr.vmem [resolvable:$true] %s345
          %351 = dma.hbm_to_vmem [thread:$0]  %s344, 256, %s346, %s333, 128, 128, 8
        $region32: #{tpu_custom_call.1} parent=23 // pred_fallthru
          _
      $region24: #{tpu_custom_call.1} parent=5 // pred_fallthru
        _
      %p352 = scmp.le.s32.totalorder 1, %s30
      %p353 = scmp.lt.s32.totalorder %s30, 3
      %p354 = pnand %p352, %p353
      %p355 = pneg %p354
      // Predicated region
      $region33: #{tpu_custom_call.1} parent=5 // pred_check
        _
      $region34: #{tpu_custom_call.1} parent=5 // pred_check_branch
        %357 = sbr.rel (%p354) target = $region36
      $region35: #{tpu_custom_call.1} parent=5 // pred_region
        %s358 = ssub.s32 %s30, 1
        %s359 = sand.u32 %s55, 1
        %s360 = scalar_lea.sflag [#allocation7], %s359
        %s361 = sand.u32 %s55, 1
        %s362 = smul.addr %s361, 16
        %s363 = scalar_lea.vmem [#allocation6], %s362
        // Predicated region
        $region37: #{tpu_custom_call.1} parent=35 // pred_check
          %p364 = pneg %p68
        $region38: #{tpu_custom_call.1} parent=35 // pred_check_branch
          %366 = sbr.rel (%p364) target = $region40
        $region39: #{tpu_custom_call.1} parent=35 // pred_region
          %367 = dma.done %s360, 256
        $region40: #{tpu_custom_call.1} parent=35 // pred_fallthru
          _
        %s368 = sand.u32 %s130, 1
        %s369 = scalar_lea.sflag [#allocation10], %s368
        %s370 = sand.u32 %s130, 1
        %s371 = smul.addr %s370, 16
        %s372 = scalar_lea.vmem [#allocation9], %s371
        // Predicated region
        $region41: #{tpu_custom_call.1} parent=35 // pred_check
          %p373 = pneg %p143
        $region42: #{tpu_custom_call.1} parent=35 // pred_check_branch
          %375 = sbr.rel (%p373) target = $region44
        $region43: #{tpu_custom_call.1} parent=35 // pred_region
          %376 = dma.done %s369, 256
        $region44: #{tpu_custom_call.1} parent=35 // pred_fallthru
          _
        %s377 = sand.u32 %s55, 1
        %s378 = scalar_lea.sflag [#allocation7], %s377
        %s379 = sand.u32 %s55, 1
        %s380 = smul.addr %s379, 16
        %s381 = scalar_lea.vmem [#allocation6], %s380
        %p382 = pneg %p68
        %p383 = pneg %p65
        %s384 = smul.u32 2, %s40
        %p385 = scmp.lt.s32.totalorder %s384, 1
        %s386 = scalar_select %p385, %s384, 1
        %s387 = smul.addr %s386, 4
        %s388 = scalar_lea.vmem %s1, %s387
        %p389 = pneg %p94
        %p390 = pneg %p91
        %p391 = pneg %p115
        %p392 = pneg %p112
        %s393 = sand.u32 %s130, 1
        %s394 = scalar_lea.sflag [#allocation10], %s393
        %s395 = sand.u32 %s130, 1
        %s396 = smul.addr %s395, 16
        %s397 = scalar_lea.vmem [#allocation9], %s396
        %p398 = pneg %p143
        %p399 = pneg %p140
        %p400 = pneg %p171
        %p401 = pneg %p168
        %s402 = sand.u32 %s158, 1
        %s403 = scalar_lea.sflag [#allocation8], %s402
        %s404 = sand.u32 %s158, 1
        %s405 = smul.addr %s404, 32
        %s406 = scalar_lea.vmem [#allocation11], %s405
        %p407 = pneg %p199
        %p408 = pneg %p196
        %s409 = sand.u32 %s35, 1
        %s410 = scalar_lea.sflag [#allocation13], %s409
        %s411 = sand.u32 %s186, 1
        %s412 = smul.addr %s411, 32
        %s413 = scalar_lea.vmem [#allocation12], %s412
        %p414 = pneg %p225
        %p415 = pneg %p222
        %s416 = sand.u32 %s35, 1
        %s417 = scalar_lea.sflag [#allocation13], %s416
        %s418 = sand.u32 %s212, 1
        %s419 = scalar_lea.vmem [#allocation14], %s418
        %p420 = pneg %p251
        %p421 = pneg %p248
        %s422 = sand.u32 %s35, 1
        %s423 = scalar_lea.sflag [#allocation16], %s422
        %s424 = sand.u32 %s238, 1
        %s425 = scalar_lea.vmem [#allocation15], %s424
        %p426 = pneg %p277
        %p427 = pneg %p274
        %s428 = sand.u32 %s35, 1
        %s429 = scalar_lea.sflag [#allocation16], %s428
        %s430 = sand.u32 %s264, 1
        %s431 = smul.addr %s430, 4
        %s432 = scalar_lea.vmem [#allocation17], %s431
        %s433 = smul.u32 2, %s40
        %p434 = scmp.lt.s32.totalorder %s433, 1
        %s435 = scalar_select %p434, %s433, 1
        %s436 = smul.addr %s435, 4
        %s437 = scalar_lea.vmem %s1, %s436
        %s438 = smul.u32 2, %s40
        %s439 = smul.u32 2, %s40
        %s440 = smul.u32 2, %s40
        %s441 = smul.u32 2, %s40
        %p443 = scmp.eq.s32.totalorder %s40, 0
        // Predicated region
        $region45: #{tpu_custom_call.1} parent=35 // pred_check
          %p444 = pneg %p443
        $region46: #{tpu_custom_call.1} parent=35 // pred_check_branch
          %446 = sbr.rel (%p444) target = $region48
        $region47: #{tpu_custom_call.1} parent=35 // pred_region
          %vm447 = vcmask 0
          %448 = vst.msk [vmem:[#allocation3] sm:$0x1] %vm447, 0.0
          %449 = vst.msk [vmem:[#allocation4] sm:$0x1] %vm447, 0.0
          %vm450 = vcmask 3072
          %451 = vst.msk [vmem:[#allocation5] sm:$0xf] %vm450, 0.0
          %v452 = vld [vmem:[%s2] sm:$0xf]
          %v453 = vld [vmem:[%s363] sm:$0xf]
          %vm454 = vcmask 64512
          %v456 = vsel %vm454, %v453, 0
          %vm458 = vcmask 1043456
          %v460 = vsel %vm458, %v452, 0
          %462 = vmatprep.subr.bf16.mxu0 0
          %463 = vmatpush1.bf16.msra.mxu0 %v460
          %464 = vmatprep.subr.bf16.mxu0 0
          %465 = vmatpush1.bf16.msra.mxu0 0
          %466 = vmatprep.subr.bf16.mxu0 0
          %467 = vmatpush1.bf16.msra.mxu0 0
          %468 = vmatprep.subr.bf16.mxu0 0
          %469 = vmatpush1.bf16.msra.mxu0 0
          %470 = vmatprep.subr.bf16.mxu0 0
          %471 = vmatpush1.bf16.msra.mxu0 0
          %472 = vmatprep.subr.bf16.mxu0 0
          %473 = vmatpush1.bf16.msra.mxu0 0
          %474 = vmatprep.subr.bf16.mxu0 0
          %475 = vmatpush1.bf16.msra.mxu0 0
          %476 = vmatprep.subr.bf16.mxu0 0
          %477 = vmatpush1.bf16.msra.mxu0 0
          %478 = vmatprep.subr.bf16.mxu0 0
          %479 = vmatpush1.bf16.msra.mxu0 0
          %480 = vmatprep.subr.bf16.mxu0 0
          %481 = vmatpush1.bf16.msra.mxu0 0
          %482 = vmatprep.subr.bf16.mxu0 0
          %483 = vmatpush1.bf16.msra.mxu0 0
          %484 = vmatprep.subr.bf16.mxu0 0
          %485 = vmatpush1.bf16.msra.mxu0 0
          %486 = vmatprep.subr.bf16.mxu0 0
          %487 = vmatpush1.bf16.msra.mxu0 0
          %488 = vmatprep.subr.bf16.mxu0 0
          %489 = vmatpush1.bf16.msra.mxu0 0
          %490 = vmatprep.subr.bf16.mxu0 0
          %491 = vmatpush1.bf16.msra.mxu0 0
          %492 = vmatprep.subr.bf16.mxu0 0
          %493 = vmatpush1.bf16.msra.mxu0 0
          %494 = vmatprep.mubr.bf16.mxu0 0
          %495 = vmatmul.mubr.bf16.gmra.mrb[0].mxu0 %v456
          %v496 = vpop.f32.mrb[0].mxu0
          %v497 = vadd.f32 0.0, %v496
          %v498 = vpop.f32.mrb[0].mxu0
          %v499 = vpop.f32.mrb[0].mxu0
          %v500 = vpop.f32.mrb[0].mxu0
          %501 = vdwg.mxu0
          %v502 = vpack.c.bf16 %v497, %v497
          %503 = vst [vmem:[#allocation2] sm:$0xf] %v502
          %s504 = scalar_lea.vmem %s363, 4 [#allocation6]
          %v505 = vld [vmem:[%s504] sm:$0xf]
          %v507 = vsel %vm454, %v505, 0
          %509 = vmatprep.subr.bf16.mxu0 0
          %510 = vmatpush1.bf16.msra.mxu0 %v460
          %511 = vmatprep.subr.bf16.mxu0 0
          %512 = vmatpush1.bf16.msra.mxu0 0
          %513 = vmatprep.subr.bf16.mxu0 0
          %514 = vmatpush1.bf16.msra.mxu0 0
          %515 = vmatprep.subr.bf16.mxu0 0
          %516 = vmatpush1.bf16.msra.mxu0 0
          %517 = vmatprep.subr.bf16.mxu0 0
          %518 = vmatpush1.bf16.msra.mxu0 0
          %519 = vmatprep.subr.bf16.mxu0 0
          %520 = vmatpush1.bf16.msra.mxu0 0
          %521 = vmatprep.subr.bf16.mxu0 0
          %522 = vmatpush1.bf16.msra.mxu0 0
          %523 = vmatprep.subr.bf16.mxu0 0
          %524 = vmatpush1.bf16.msra.mxu0 0
          %525 = vmatprep.subr.bf16.mxu0 0
          %526 = vmatpush1.bf16.msra.mxu0 0
          %527 = vmatprep.subr.bf16.mxu0 0
          %528 = vmatpush1.bf16.msra.mxu0 0
          %529 = vmatprep.subr.bf16.mxu0 0
          %530 = vmatpush1.bf16.msra.mxu0 0
          %531 = vmatprep.subr.bf16.mxu0 0
          %532 = vmatpush1.bf16.msra.mxu0 0
          %533 = vmatprep.subr.bf16.mxu0 0
          %534 = vmatpush1.bf16.msra.mxu0 0
          %535 = vmatprep.subr.bf16.mxu0 0
          %536 = vmatpush1.bf16.msra.mxu0 0
          %537 = vmatprep.subr.bf16.mxu0 0
          %538 = vmatpush1.bf16.msra.mxu0 0
          %539 = vmatprep.subr.bf16.mxu0 0
          %540 = vmatpush1.bf16.msra.mxu0 0
          %541 = vmatprep.mubr.bf16.mxu0 0
          %542 = vmatmul.mubr.bf16.gmra.mrb[0].mxu0 %v507
          %v543 = vpop.f32.mrb[0].mxu0
          %v544 = vadd.f32 0.0, %v543
          %v545 = vpop.f32.mrb[0].mxu0
          %v546 = vpop.f32.mrb[0].mxu0
          %v547 = vpop.f32.mrb[0].mxu0
          %548 = vdwg.mxu0
          %v549 = vpack.c.bf16 %v544, %v544
          %s550 = scalar_lea.vmem [#allocation2], 4
          %551 = vst [vmem:[%s550] sm:$0xf] %v549
          %s552 = scalar_lea.vmem %s363, 8 [#allocation6]
          %v553 = vld [vmem:[%s552] sm:$0xf]
          %v555 = vsel %vm454, %v553, 0
          %557 = vmatprep.subr.bf16.mxu0 0
          %558 = vmatpush1.bf16.msra.mxu0 %v460
          %559 = vmatprep.subr.bf16.mxu0 0
          %560 = vmatpush1.bf16.msra.mxu0 0
          %561 = vmatprep.subr.bf16.mxu0 0
          %562 = vmatpush1.bf16.msra.mxu0 0
          %563 = vmatprep.subr.bf16.mxu0 0
          %564 = vmatpush1.bf16.msra.mxu0 0
          %565 = vmatprep.subr.bf16.mxu0 0
          %566 = vmatpush1.bf16.msra.mxu0 0
          %567 = vmatprep.subr.bf16.mxu0 0
          %568 = vmatpush1.bf16.msra.mxu0 0
          %569 = vmatprep.subr.bf16.mxu0 0
          %570 = vmatpush1.bf16.msra.mxu0 0
          %571 = vmatprep.subr.bf16.mxu0 0
          %572 = vmatpush1.bf16.msra.mxu0 0
          %573 = vmatprep.subr.bf16.mxu0 0
          %574 = vmatpush1.bf16.msra.mxu0 0
          %575 = vmatprep.subr.bf16.mxu0 0
          %576 = vmatpush1.bf16.msra.mxu0 0
          %577 = vmatprep.subr.bf16.mxu0 0
          %578 = vmatpush1.bf16.msra.mxu0 0
          %579 = vmatprep.subr.bf16.mxu0 0
          %580 = vmatpush1.bf16.msra.mxu0 0
          %581 = vmatprep.subr.bf16.mxu0 0
          %582 = vmatpush1.bf16.msra.mxu0 0
          %583 = vmatprep.subr.bf16.mxu0 0
          %584 = vmatpush1.bf16.msra.mxu0 0
          %585 = vmatprep.subr.bf16.mxu0 0
          %586 = vmatpush1.bf16.msra.mxu0 0
          %587 = vmatprep.subr.bf16.mxu0 0
          %588 = vmatpush1.bf16.msra.mxu0 0
          %589 = vmatprep.mubr.bf16.mxu0 0
          %590 = vmatmul.mubr.bf16.gmra.mrb[0].mxu0 %v555
          %v591 = vpop.f32.mrb[0].mxu0
          %v592 = vadd.f32 0.0, %v591
          %v593 = vpop.f32.mrb[0].mxu0
          %v594 = vpop.f32.mrb[0].mxu0
          %v595 = vpop.f32.mrb[0].mxu0
          %596 = vdwg.mxu0
          %v597 = vpack.c.bf16 %v592, %v592
          %s598 = scalar_lea.vmem [#allocation2], 8
          %599 = vst [vmem:[%s598] sm:$0xf] %v597
          %s600 = scalar_lea.vmem %s363, 12 [#allocation6]
          %v601 = vld [vmem:[%s600] sm:$0xf]
          %v603 = vsel %vm454, %v601, 0
          %605 = vmatprep.subr.bf16.mxu0 0
          %606 = vmatpush1.bf16.msra.mxu0 %v460
          %607 = vmatprep.subr.bf16.mxu0 0
          %608 = vmatpush1.bf16.msra.mxu0 0
          %609 = vmatprep.subr.bf16.mxu0 0
          %610 = vmatpush1.bf16.msra.mxu0 0
          %611 = vmatprep.subr.bf16.mxu0 0
          %612 = vmatpush1.bf16.msra.mxu0 0
          %613 = vmatprep.subr.bf16.mxu0 0
          %614 = vmatpush1.bf16.msra.mxu0 0
          %615 = vmatprep.subr.bf16.mxu0 0
          %616 = vmatpush1.bf16.msra.mxu0 0
          %617 = vmatprep.subr.bf16.mxu0 0
          %618 = vmatpush1.bf16.msra.mxu0 0
          %619 = vmatprep.subr.bf16.mxu0 0
          %620 = vmatpush1.bf16.msra.mxu0 0
          %621 = vmatprep.subr.bf16.mxu0 0
          %622 = vmatpush1.bf16.msra.mxu0 0
          %623 = vmatprep.subr.bf16.mxu0 0
          %624 = vmatpush1.bf16.msra.mxu0 0
          %625 = vmatprep.subr.bf16.mxu0 0
          %626 = vmatpush1.bf16.msra.mxu0 0
          %627 = vmatprep.subr.bf16.mxu0 0
          %628 = vmatpush1.bf16.msra.mxu0 0
          %629 = vmatprep.subr.bf16.mxu0 0
          %630 = vmatpush1.bf16.msra.mxu0 0
          %631 = vmatprep.subr.bf16.mxu0 0
          %632 = vmatpush1.bf16.msra.mxu0 0
          %633 = vmatprep.subr.bf16.mxu0 0
          %634 = vmatpush1.bf16.msra.mxu0 0
          %635 = vmatprep.subr.bf16.mxu0 0
          %636 = vmatpush1.bf16.msra.mxu0 0
          %637 = vmatprep.mubr.bf16.mxu0 0
          %638 = vmatmul.mubr.bf16.gmra.mrb[0].mxu0 %v603
          %v639 = vpop.f32.mrb[0].mxu0
          %v640 = vadd.f32 0.0, %v639
          %v641 = vpop.f32.mrb[0].mxu0
          %v642 = vpop.f32.mrb[0].mxu0
          %v643 = vpop.f32.mrb[0].mxu0
          %644 = vdwg.mxu0
          %v645 = vpack.c.bf16 %v640, %v640
          %s646 = scalar_lea.vmem [#allocation2], 12
          %647 = vst [vmem:[%s646] sm:$0xf] %v645
        $region48: #{tpu_custom_call.1} parent=35 // pred_fallthru
          _
        %v648 = vld [vmem:[%s437] sm:$0xf]
        %v649 = vld [vmem:[%s437 + $0x4] sm:$0xf]
        %v650 = vld [vmem:[#allocation2] sm:$0xf]
        %v651 = vld [vmem:[#allocation2 + $0x4] sm:$0xf]
        %v652 = vld [vmem:[#allocation2 + $0x8] sm:$0xf]
        %v653 = vld [vmem:[#allocation2 + $0xc] sm:$0xf]
        %v656 = vunpack.c.l.b16 %v648
        %v657 = vunpack.c.l.b16 %v649
        %v658 = vpack.c.b16 %v657, %v656
        %vm659 = vcmask 64512
        %v661 = vsel %vm659, %v658, 0
        %vm663 = vcmask 1043456
        %v665 = vsel %vm663, %v650, 0
        %667 = vmatprep.subr.bf16.mxu0 0
        %668 = vmatpush1.bf16.msra.mxu0 %v665
        %669 = vmatprep.subr.bf16.mxu0 0
        %670 = vmatpush1.bf16.msra.mxu0 0
        %671 = vmatprep.subr.bf16.mxu0 0
        %672 = vmatpush1.bf16.msra.mxu0 0
        %673 = vmatprep.subr.bf16.mxu0 0
        %674 = vmatpush1.bf16.msra.mxu0 0
        %675 = vmatprep.subr.bf16.mxu0 0
        %676 = vmatpush1.bf16.msra.mxu0 0
        %677 = vmatprep.subr.bf16.mxu0 0
        %678 = vmatpush1.bf16.msra.mxu0 0
        %679 = vmatprep.subr.bf16.mxu0 0
        %680 = vmatpush1.bf16.msra.mxu0 0
        %681 = vmatprep.subr.bf16.mxu0 0
        %682 = vmatpush1.bf16.msra.mxu0 0
        %683 = vmatprep.subr.bf16.mxu0 0
        %684 = vmatpush1.bf16.msra.mxu0 0
        %685 = vmatprep.subr.bf16.mxu0 0
        %686 = vmatpush1.bf16.msra.mxu0 0
        %687 = vmatprep.subr.bf16.mxu0 0
        %688 = vmatpush1.bf16.msra.mxu0 0
        %689 = vmatprep.subr.bf16.mxu0 0
        %690 = vmatpush1.bf16.msra.mxu0 0
        %691 = vmatprep.subr.bf16.mxu0 0
        %692 = vmatpush1.bf16.msra.mxu0 0
        %693 = vmatprep.subr.bf16.mxu0 0
        %694 = vmatpush1.bf16.msra.mxu0 0
        %695 = vmatprep.subr.bf16.mxu0 0
        %696 = vmatpush1.bf16.msra.mxu0 0
        %697 = vmatprep.subr.bf16.mxu0 0
        %698 = vmatpush1.bf16.msra.mxu0 0
        %699 = vmatprep.mubr.bf16.mxu0 0
        %700 = vmatmul.mubr.bf16.gmra.mrb[0].mxu0 %v661
        %v701 = vpop.f32.mrb[0].mxu0
        %v702 = vadd.f32 0.0, %v701
        %v703 = vpop.f32.mrb[0].mxu0
        %v704 = vpop.f32.mrb[0].mxu0
        %v705 = vadd.f32 0.0, %v704
        %v706 = vpop.f32.mrb[0].mxu0
        %707 = vdwg.mxu0
        %v709 = vsel %vm663, %v651, 0
        %711 = vmatprep.subr.bf16.mxu0 0
        %712 = vmatpush1.bf16.msra.mxu0 %v709
        %713 = vmatprep.subr.bf16.mxu0 0
        %714 = vmatpush1.bf16.msra.mxu0 0
        %715 = vmatprep.subr.bf16.mxu0 0
        %716 = vmatpush1.bf16.msra.mxu0 0
        %717 = vmatprep.subr.bf16.mxu0 0
        %718 = vmatpush1.bf16.msra.mxu0 0
        %719 = vmatprep.subr.bf16.mxu0 0
        %720 = vmatpush1.bf16.msra.mxu0 0
        %721 = vmatprep.subr.bf16.mxu0 0
        %722 = vmatpush1.bf16.msra.mxu0 0
        %723 = vmatprep.subr.bf16.mxu0 0
        %724 = vmatpush1.bf16.msra.mxu0 0
        %725 = vmatprep.subr.bf16.mxu0 0
        %726 = vmatpush1.bf16.msra.mxu0 0
        %727 = vmatprep.subr.bf16.mxu0 0
        %728 = vmatpush1.bf16.msra.mxu0 0
        %729 = vmatprep.subr.bf16.mxu0 0
        %730 = vmatpush1.bf16.msra.mxu0 0
        %731 = vmatprep.subr.bf16.mxu0 0
        %732 = vmatpush1.bf16.msra.mxu0 0
        %733 = vmatprep.subr.bf16.mxu0 0
        %734 = vmatpush1.bf16.msra.mxu0 0
        %735 = vmatprep.subr.bf16.mxu0 0
        %736 = vmatpush1.bf16.msra.mxu0 0
        %737 = vmatprep.subr.bf16.mxu0 0
        %738 = vmatpush1.bf16.msra.mxu0 0
        %739 = vmatprep.subr.bf16.mxu0 0
        %740 = vmatpush1.bf16.msra.mxu0 0
        %741 = vmatprep.subr.bf16.mxu0 0
        %742 = vmatpush1.bf16.msra.mxu0 0
        %743 = vmatprep.mubr.bf16.mxu0 0
        %744 = vmatmul.mubr.bf16.gmra.mrb[0].mxu0 %v661
        %v745 = vpop.f32.mrb[0].mxu0
        %v746 = vadd.f32 0.0, %v745
        %v747 = vpop.f32.mrb[0].mxu0
        %v748 = vpop.f32.mrb[0].mxu0
        %v749 = vadd.f32 0.0, %v748
        %v750 = vpop.f32.mrb[0].mxu0
        %751 = vdwg.mxu0
        %v753 = vsel %vm663, %v652, 0
        %755 = vmatprep.subr.bf16.mxu0 0
        %756 = vmatpush1.bf16.msra.mxu0 %v753
        %757 = vmatprep.subr.bf16.mxu0 0
        %758 = vmatpush1.bf16.msra.mxu0 0
        %759 = vmatprep.subr.bf16.mxu0 0
        %760 = vmatpush1.bf16.msra.mxu0 0
        %761 = vmatprep.subr.bf16.mxu0 0
        %762 = vmatpush1.bf16.msra.mxu0 0
        %763 = vmatprep.subr.bf16.mxu0 0
        %764 = vmatpush1.bf16.msra.mxu0 0
        %765 = vmatprep.subr.bf16.mxu0 0
        %766 = vmatpush1.bf16.msra.mxu0 0
        %767 = vmatprep.subr.bf16.mxu0 0
        %768 = vmatpush1.bf16.msra.mxu0 0
        %769 = vmatprep.subr.bf16.mxu0 0
        %770 = vmatpush1.bf16.msra.mxu0 0
        %771 = vmatprep.subr.bf16.mxu0 0
        %772 = vmatpush1.bf16.msra.mxu0 0
        %773 = vmatprep.subr.bf16.mxu0 0
        %774 = vmatpush1.bf16.msra.mxu0 0
        %775 = vmatprep.subr.bf16.mxu0 0
        %776 = vmatpush1.bf16.msra.mxu0 0
        %777 = vmatprep.subr.bf16.mxu0 0
        %778 = vmatpush1.bf16.msra.mxu0 0
        %779 = vmatprep.subr.bf16.mxu0 0
        %780 = vmatpush1.bf16.msra.mxu0 0
        %781 = vmatprep.subr.bf16.mxu0 0
        %782 = vmatpush1.bf16.msra.mxu0 0
        %783 = vmatprep.subr.bf16.mxu0 0
        %784 = vmatpush1.bf16.msra.mxu0 0
        %785 = vmatprep.subr.bf16.mxu0 0
        %786 = vmatpush1.bf16.msra.mxu0 0
        %787 = vmatprep.mubr.bf16.mxu0 0
        %788 = vmatmul.mubr.bf16.gmra.mrb[0].mxu0 %v661
        %v789 = vpop.f32.mrb[0].mxu0
        %v790 = vadd.f32 0.0, %v789
        %v791 = vpop.f32.mrb[0].mxu0
        %v792 = vpop.f32.mrb[0].mxu0
        %v793 = vadd.f32 0.0, %v792
        %v794 = vpop.f32.mrb[0].mxu0
        %795 = vdwg.mxu0
        %v797 = vsel %vm663, %v653, 0
        %799 = vmatprep.subr.bf16.mxu0 0
        %800 = vmatpush1.bf16.msra.mxu0 %v797
        %801 = vmatprep.subr.bf16.mxu0 0
        %802 = vmatpush1.bf16.msra.mxu0 0
        %803 = vmatprep.subr.bf16.mxu0 0
        %804 = vmatpush1.bf16.msra.mxu0 0
        %805 = vmatprep.subr.bf16.mxu0 0
        %806 = vmatpush1.bf16.msra.mxu0 0
        %807 = vmatprep.subr.bf16.mxu0 0
        %808 = vmatpush1.bf16.msra.mxu0 0
        %809 = vmatprep.subr.bf16.mxu0 0
        %810 = vmatpush1.bf16.msra.mxu0 0
        %811 = vmatprep.subr.bf16.mxu0 0
        %812 = vmatpush1.bf16.msra.mxu0 0
        %813 = vmatprep.subr.bf16.mxu0 0
        %814 = vmatpush1.bf16.msra.mxu0 0
        %815 = vmatprep.subr.bf16.mxu0 0
        %816 = vmatpush1.bf16.msra.mxu0 0
        %817 = vmatprep.subr.bf16.mxu0 0
        %818 = vmatpush1.bf16.msra.mxu0 0
        %819 = vmatprep.subr.bf16.mxu0 0
        %820 = vmatpush1.bf16.msra.mxu0 0
        %821 = vmatprep.subr.bf16.mxu0 0
        %822 = vmatpush1.bf16.msra.mxu0 0
        %823 = vmatprep.subr.bf16.mxu0 0
        %824 = vmatpush1.bf16.msra.mxu0 0
        %825 = vmatprep.subr.bf16.mxu0 0
        %826 = vmatpush1.bf16.msra.mxu0 0
        %827 = vmatprep.subr.bf16.mxu0 0
        %828 = vmatpush1.bf16.msra.mxu0 0
        %829 = vmatprep.subr.bf16.mxu0 0
        %830 = vmatpush1.bf16.msra.mxu0 0
        %831 = vmatprep.mubr.bf16.mxu0 0
        %832 = vmatmul.mubr.bf16.gmra.mrb[0].mxu0 %v661
        %v833 = vpop.f32.mrb[0].mxu0
        %v834 = vadd.f32 0.0, %v833
        %v835 = vpop.f32.mrb[0].mxu0
        %v836 = vpop.f32.mrb[0].mxu0
        %v837 = vadd.f32 0.0, %v836
        %v838 = vpop.f32.mrb[0].mxu0
        %839 = vdwg.mxu0
        %v840 = vld [vmem:[%s372] sm:$0xff]
        %v841 = vld [vmem:[%s372 + $0x8] sm:$0xff]
        %vm842 = vcmp.ne.s32.totalorder %v840, 255
        %vm843 = vcmp.ne.s32.totalorder %v841, 255
        %v844 = vsel %vm842, 1, 0
        %v845 = vsel %vm843, 1, 0
        %v846 = vcvt.s32.f32 %v844
        %v847 = vcvt.s32.f32 %v845
        %v848 = vmax.f32 %v702, %v790
        %v849 = vmax.f32 %v746, %v834
        %v850 = vmax.f32 %v848, %v849
        %v851 = vmax.f32 %v705, %v793
        %v852 = vmax.f32 %v749, %v837
        %v853 = vmax.f32 %v851, %v852
        %v854 = vsub.f32 %v702, %v850
        %v855 = vsub.f32 %v705, %v853
        %v856 = vsub.f32 %v746, %v850
        %v857 = vsub.f32 %v749, %v853
        %v858 = vsub.f32 %v790, %v850
        %v859 = vsub.f32 %v793, %v853
        %v860 = vsub.f32 %v834, %v850
        %v861 = vsub.f32 %v837, %v853
        %v862 = vmul.f32 %v854, 1.442695
        %v863 = vpow.pop %v862
        %v864 = vmul.f32 %v855, 1.442695
        %v865 = vpow.pop %v864
        %v866 = vmul.f32 %v856, 1.442695
        %v867 = vpow.pop %v866
        %v868 = vmul.f32 %v857, 1.442695
        %v869 = vpow.pop %v868
        %v870 = vmul.f32 %v858, 1.442695
        %v871 = vpow.pop %v870
        %v872 = vmul.f32 %v859, 1.442695
        %v873 = vpow.pop %v872
        %v874 = vmul.f32 %v860, 1.442695
        %v875 = vpow.pop %v874
        %v876 = vmul.f32 %v861, 1.442695
        %v877 = vpow.pop %v876
        %v878 = vadd.f32 %v863, %v867
        %v879 = vadd.f32 %v878, %v871
        %v880 = vadd.f32 %v879, %v875
        %v881 = vadd.f32 %v865, %v869
        %v882 = vadd.f32 %v881, %v873
        %v883 = vadd.f32 %v882, %v877
        %v884 = vlog2.pop %v880
        %v885 = vmul.f32 %v884, 0.6931472
        %v886 = vlog2.pop %v883
        %v887 = vmul.f32 %v886, 0.6931472
        %v888 = vadd.f32 %v885, %v850
        %v889 = vadd.f32 %v887, %v853
        %vm890 = vcmp.eq.s32.totalorder %v840, 0
        %vm891 = vcmp.eq.s32.totalorder %v841, 0
        %vm892 = vcmp.eq.s32.totalorder %v840, 1
        %vm893 = vcmp.eq.s32.totalorder %v841, 1
        %vm894 = vcmp.eq.s32.totalorder %v840, 2
        %vm895 = vcmp.eq.s32.totalorder %v841, 2
        %vm896 = vcmp.eq.s32.totalorder %v840, 3
        %vm897 = vcmp.eq.s32.totalorder %v841, 3
        %v898 = vsel %vm890, 1, 0
        %v899 = vsel %vm891, 1, 0
        %v900 = vsel %vm892, 1, 0
        %v901 = vsel %vm893, 1, 0
        %v902 = vsel %vm894, 1, 0
        %v903 = vsel %vm895, 1, 0
        %v904 = vsel %vm896, 1, 0
        %v905 = vsel %vm897, 1, 0
        %v906 = vcvt.s32.f32 %v898
        %v907 = vcvt.s32.f32 %v899
        %v908 = vcvt.s32.f32 %v900
        %v909 = vcvt.s32.f32 %v901
        %v910 = vcvt.s32.f32 %v902
        %v911 = vcvt.s32.f32 %v903
        %v912 = vcvt.s32.f32 %v904
        %v913 = vcvt.s32.f32 %v905
        %v914 = vmul.f32 %v906, %v702
        %v915 = vmul.f32 %v907, %v705
        %v916 = vmul.f32 %v908, %v746
        %v917 = vmul.f32 %v909, %v749
        %v918 = vmul.f32 %v910, %v790
        %v919 = vmul.f32 %v911, %v793
        %v920 = vmul.f32 %v912, %v834
        %v921 = vmul.f32 %v913, %v837
        %v922 = vadd.f32 %v914, %v916
        %v923 = vadd.f32 %v922, %v918
        %v924 = vadd.f32 %v923, %v920
        %v925 = vadd.f32 %v915, %v917
        %v926 = vadd.f32 %v925, %v919
        %v927 = vadd.f32 %v926, %v921
        %v928 = vld [vmem:[#allocation3] sm:$0x1]
        %v929 = vsub.f32 %v888, %v924
        %v930 = vsub.f32 %v889, %v927
        %v931 = vmul.f32 %v846, %v929
        %v932 = vmul.f32 %v847, %v930
        %v933 = vadd.f32 %v931, %v932
        %934 = vadd.xlane.f32.xlu0 %v933
        %v935 = vpop.xlane.xlu0 %934
        %v936 = vrot.slane %v935, 4
        %v937 = vadd.f32 %v935, %v936
        %v938 = vrot.slane %v937, 2
        %v939 = vadd.f32 %v937, %v938
        %v940 = vrot.slane %v939, 1
        %v941 = vadd.f32 %v939, %v940
        %s942 = vtos %v941
        %v943 = vstv %s942
        %v944 = vadd.f32 %v928, %v943
        %vm945 = vcmask 0
        %946 = vst.msk [vmem:[#allocation3] sm:$0x1] %vm945, %v944
        %v947 = vld [vmem:[#allocation4] sm:$0x1]
        %v948 = vadd.f32 %v846, %v847
        %949 = vadd.xlane.f32.xlu0 %v948
        %v950 = vpop.xlane.xlu0 %949
        %v951 = vrot.slane %v950, 4
        %v952 = vadd.f32 %v950, %v951
        %v953 = vrot.slane %v952, 2
        %v954 = vadd.f32 %v952, %v953
        %v955 = vrot.slane %v954, 1
        %v956 = vadd.f32 %v954, %v955
        %s957 = vtos %v956
        %v958 = vstv %s957
        %v959 = vadd.f32 %v947, %v958
        %960 = vst.msk [vmem:[#allocation4] sm:$0x1] %vm945, %v959
        %v961 = vrcp.pop %v880
        %v962 = vrcp.pop %v883
        %v963 = vmul.f32 %v863, %v961
        %v964 = vmul.f32 %v865, %v962
        %v965 = vmul.f32 %v867, %v961
        %v966 = vmul.f32 %v869, %v962
        %v967 = vmul.f32 %v871, %v961
        %v968 = vmul.f32 %v873, %v962
        %v969 = vmul.f32 %v875, %v961
        %v970 = vmul.f32 %v877, %v962
        %v971 = vmul.f32 %v906, %v846
        %v972 = vmul.f32 %v907, %v847
        %v973 = vmul.f32 %v908, %v846
        %v974 = vmul.f32 %v909, %v847
        %v975 = vmul.f32 %v910, %v846
        %v976 = vmul.f32 %v911, %v847
        %v977 = vmul.f32 %v912, %v846
        %v978 = vmul.f32 %v913, %v847
        %v979 = vsub.f32 %v906, %v963
        %v980 = vsub.f32 %v907, %v964
        %v981 = vsub.f32 %v908, %v965
        %v982 = vsub.f32 %v909, %v966
        %v983 = vsub.f32 %v910, %v967
        %v984 = vsub.f32 %v911, %v968
        %v985 = vsub.f32 %v912, %v969
        %v986 = vsub.f32 %v913, %v970
        %v987 = vand.u32 2147483647, %v979
        %v988 = vand.u32 2147483647, %v980
        %v989 = vand.u32 2147483647, %v981
        %v990 = vand.u32 2147483647, %v982
        %v991 = vand.u32 2147483647, %v983
        %v992 = vand.u32 2147483647, %v984
        %v993 = vand.u32 2147483647, %v985
        %v994 = vand.u32 2147483647, %v986
        %v995 = vmul.f32 %v987, %v846
        %v996 = vmul.f32 %v988, %v847
        %v997 = vmul.f32 %v989, %v846
        %v998 = vmul.f32 %v990, %v847
        %v999 = vmul.f32 %v991, %v846
        %v1000 = vmul.f32 %v992, %v847
        %v1001 = vmul.f32 %v993, %v846
        %v1002 = vmul.f32 %v994, %v847
        %v1003 = vsub.f32 0.0, %v995
        %v1004 = vsub.f32 0.0, %v996
        %v1005 = vsub.f32 0.0, %v997
        %v1006 = vsub.f32 0.0, %v998
        %v1007 = vsub.f32 0.0, %v999
        %v1008 = vsub.f32 0.0, %v1000
        %v1009 = vsub.f32 0.0, %v1001
        %v1010 = vsub.f32 0.0, %v1002
        %v1011 = vpack.c.bf16 %v1004, %v1003
        %v1012 = vpack.c.bf16 %v1006, %v1005
        %v1013 = vpack.c.bf16 %v1008, %v1007
        %v1014 = vpack.c.bf16 %v1010, %v1009
        %v1019 = vunpack.c.l.b16 %v1011
        %v1020 = vunpack.c.h.b16 %v1011
        %v1021 = vunpack.c.l.b16 %v1012
        %v1022 = vunpack.c.h.b16 %v1012
        %v1023 = vunpack.c.l.b16 %v1013
        %v1024 = vunpack.c.h.b16 %v1013
        %v1025 = vunpack.c.l.b16 %v1014
        %v1026 = vunpack.c.h.b16 %v1014
        %v1027 = vpack.c.b16 %v1019, %v1019
        %v1028 = vpack.c.b16 %v1020, %v1020
        %v1029 = vpack.c.b16 %v1021, %v1021
        %v1030 = vpack.c.b16 %v1022, %v1022
        %v1031 = vpack.c.b16 %v1023, %v1023
        %v1032 = vpack.c.b16 %v1024, %v1024
        %v1033 = vpack.c.b16 %v1025, %v1025
        %v1034 = vpack.c.b16 %v1026, %v1026
        %1043 = vst [vmem:[%s406] sm:$0xf] %v1027
        %1044 = vst [vmem:[%s406 + $0x4] sm:$0xf] %v1028
        %1045 = vst [vmem:[%s406 + $0x8] sm:$0xf] %v1029
        %1046 = vst [vmem:[%s406 + $0xc] sm:$0xf] %v1030
        %1047 = vst [vmem:[%s406 + $0x10] sm:$0xf] %v1031
        %1048 = vst [vmem:[%s406 + $0x14] sm:$0xf] %v1032
        %1049 = vst [vmem:[%s406 + $0x18] sm:$0xf] %v1033
        %1050 = vst [vmem:[%s406 + $0x1c] sm:$0xf] %v1034
        %v1051 = vpack.c.bf16 %v972, %v971
        %v1052 = vpack.c.bf16 %v974, %v973
        %v1053 = vpack.c.bf16 %v976, %v975
        %v1054 = vpack.c.bf16 %v978, %v977
        %v1059 = vunpack.c.l.b16 %v1051
        %v1060 = vunpack.c.h.b16 %v1051
        %v1061 = vunpack.c.l.b16 %v1052
        %v1062 = vunpack.c.h.b16 %v1052
        %v1063 = vunpack.c.l.b16 %v1053
        %v1064 = vunpack.c.h.b16 %v1053
        %v1065 = vunpack.c.l.b16 %v1054
        %v1066 = vunpack.c.h.b16 %v1054
        %v1067 = vpack.c.b16 %v1059, %v1059
        %v1068 = vpack.c.b16 %v1060, %v1060
        %v1069 = vpack.c.b16 %v1061, %v1061
        %v1070 = vpack.c.b16 %v1062, %v1062
        %v1071 = vpack.c.b16 %v1063, %v1063
        %v1072 = vpack.c.b16 %v1064, %v1064
        %v1073 = vpack.c.b16 %v1065, %v1065
        %v1074 = vpack.c.b16 %v1066, %v1066
        %1083 = vst [vmem:[%s413] sm:$0xf] %v1067
        %1084 = vst [vmem:[%s413 + $0x4] sm:$0xf] %v1068
        %1085 = vst [vmem:[%s413 + $0x8] sm:$0xf] %v1069
        %1086 = vst [vmem:[%s413 + $0xc] sm:$0xf] %v1070
        %1087 = vst [vmem:[%s413 + $0x10] sm:$0xf] %v1071
        %1088 = vst [vmem:[%s413 + $0x14] sm:$0xf] %v1072
        %1089 = vst [vmem:[%s413 + $0x18] sm:$0xf] %v1073
        %1090 = vst [vmem:[%s413 + $0x1c] sm:$0xf] %v1074
        %v1091 = vld [vmem:[#allocation5] sm:$0xf]
        %1092 = vadd.xlane.f32.xlu0 %v971
        %v1093 = vpop.xlane.xlu0 %1092
        %1094 = vadd.xlane.f32.xlu0 %v972
        %v1095 = vpop.xlane.xlu0 %1094
        %1096 = vadd.xlane.f32.xlu0 %v973
        %v1097 = vpop.xlane.xlu0 %1096
        %1098 = vadd.xlane.f32.xlu0 %v974
        %v1099 = vpop.xlane.xlu0 %1098
        %1100 = vadd.xlane.f32.xlu0 %v975
        %v1101 = vpop.xlane.xlu0 %1100
        %1102 = vadd.xlane.f32.xlu0 %v976
        %v1103 = vpop.xlane.xlu0 %1102
        %1104 = vadd.xlane.f32.xlu0 %v977
        %v1105 = vpop.xlane.xlu0 %1104
        %1106 = vadd.xlane.f32.xlu0 %v978
        %v1107 = vpop.xlane.xlu0 %1106
        %v1116 = vlaneseq
        %v1117 = vand.u32 %v1116, 127
        %v1118 = vlaneseq
        %v1119 = vshrl.u32 %v1118, 7
        %v1120 = vsub.s32 %v1117, %v1119
        %v1121 = vrot.slane %v1093, %v1120
        %v1122 = vadd.s32 %v1117, 4294967288
        %v1123 = vlaneseq
        %v1124 = vshrl.u32 %v1123, 7
        %v1125 = vsub.s32 %v1122, %v1124
        %v1126 = vrot.slane %v1095, %v1125
        %vm1127 = vcmask 130112
        %v1128 = vsel %vm1127, %v1126, %v1121
        %v1129 = vlaneseq
        %v1130 = vshrl.u32 %v1129, 7
        %v1131 = vsub.s32 %v1117, %v1130
        %v1132 = vrot.slane %v1097, %v1131
        %v1133 = vlaneseq
        %v1134 = vshrl.u32 %v1133, 7
        %v1135 = vsub.s32 %v1122, %v1134
        %v1136 = vrot.slane %v1099, %v1135
        %v1137 = vsel %vm1127, %v1136, %v1132
        %v1138 = vlaneseq
        %v1139 = vshrl.u32 %v1138, 7
        %v1140 = vsub.s32 %v1117, %v1139
        %v1141 = vrot.slane %v1101, %v1140
        %v1142 = vlaneseq
        %v1143 = vshrl.u32 %v1142, 7
        %v1144 = vsub.s32 %v1122, %v1143
        %v1145 = vrot.slane %v1103, %v1144
        %v1146 = vsel %vm1127, %v1145, %v1141
        %v1147 = vlaneseq
        %v1148 = vshrl.u32 %v1147, 7
        %v1149 = vsub.s32 %v1117, %v1148
        %v1150 = vrot.slane %v1105, %v1149
        %v1151 = vlaneseq
        %v1152 = vshrl.u32 %v1151, 7
        %v1153 = vsub.s32 %v1122, %v1152
        %v1154 = vrot.slane %v1107, %v1153
        %v1155 = vsel %vm1127, %v1154, %v1150
        %vm1156 = vcmask 1041409
        %v1157 = vsel %vm1156, %v1137, %v1128
        %vm1158 = vcmask 1042434
        %v1159 = vsel %vm1158, %v1146, %v1157
        %vm1160 = vcmask 1043459
        %v1161 = vsel %vm1160, %v1155, %v1159
        %vm1163 = vcmask 125952
        %v1164 = vsel %vm1163, %v1161, 0.0
        %1165 = vadd.xlane.f32.xlu0 %v1164
        %v1166 = vpop.xlane.xlu0 %1165
        %v1167 = vadd.f32 %v1091, %v1166
        %vm1168 = vcmask 3072
        %1169 = vst.msk [vmem:[#allocation5] sm:$0xf] %vm1168, %v1167
        // Predicated region
        $region49: #{tpu_custom_call.1} parent=35 // pred_check
          %p1170 = pneg %p443
        $region50: #{tpu_custom_call.1} parent=35 // pred_check_branch
          %1172 = sbr.rel (%p1170) target = $region52
        $region51: #{tpu_custom_call.1} parent=35 // pred_region
          %v1173 = vld [vmem:[#allocation3] sm:$0x1]
          %1175 = vset.pattern.permute.xlu0 0
          %1176 = vperm.xlu0 %1175, %v1173
          %v1177 = vpop.permute.xlu0 %1176
          %v1179 = vlaneseq
          %v1180 = vshrl.u32 %v1179, 7
          %v1181 = vsub.s32 0, %v1180
          %v1182 = vrot.slane %v1177, %v1181
          %1183 = vst [vmem:[%s419] sm:$0x1] %v1182
          %v1184 = vld [vmem:[#allocation4] sm:$0x1]
          %1186 = vset.pattern.permute.xlu0 0
          %1187 = vperm.xlu0 %1186, %v1184
          %v1188 = vpop.permute.xlu0 %1187
          %v1190 = vlaneseq
          %v1191 = vshrl.u32 %v1190, 7
          %v1192 = vsub.s32 0, %v1191
          %v1193 = vrot.slane %v1188, %v1192
          %1194 = vst [vmem:[%s425] sm:$0x1] %v1193
          %v1195 = vld [vmem:[#allocation5] sm:$0xf]
          %1197 = vset.pattern.permute.xlu0 0
          %1198 = vperm.xlu0 %1197, %v1195
          %v1199 = vpop.permute.xlu0 %1198
          %1201 = vst [vmem:[%s432] sm:$0xf] %v1199
        $region52: #{tpu_custom_call.1} parent=35 // pred_fallthru
          _
        %s1202 = sand.u32 %s158, 1
        %s1203 = scalar_lea.sflag [#allocation8], %s1202
        %s1204 = sand.u32 %s158, 1
        %s1205 = smul.addr %s1204, 32
        %s1206 = scalar_lea.vmem [#allocation11], %s1205
        %s1207 = sand.u32 %s35, 1
        %s1208 = scalar_lea.sflag [#allocation13], %s1207
        %s1209 = sand.u32 %s186, 1
        %s1210 = smul.addr %s1209, 32
        %s1211 = scalar_lea.vmem [#allocation12], %s1210
        %s1212 = sand.u32 %s35, 1
        %s1213 = scalar_lea.sflag [#allocation13], %s1212
        %s1214 = sand.u32 %s212, 1
        %s1215 = scalar_lea.vmem [#allocation14], %s1214
        %s1216 = sand.u32 %s35, 1
        %s1217 = scalar_lea.sflag [#allocation16], %s1216
        %s1218 = sand.u32 %s238, 1
        %s1219 = scalar_lea.vmem [#allocation15], %s1218
        %s1220 = sand.u32 %s35, 1
        %s1221 = scalar_lea.sflag [#allocation16], %s1220
        %s1222 = sand.u32 %s264, 1
        %s1223 = smul.addr %s1222, 4
        %s1224 = scalar_lea.vmem [#allocation17], %s1223
        // Predicated region
        $region53: #{tpu_custom_call.1} parent=35 // pred_check
          %p1225 = pneg %p168
        $region54: #{tpu_custom_call.1} parent=35 // pred_check_branch
          %1227 = sbr.rel (%p1225) target = $region56
        $region55: #{tpu_custom_call.1} parent=35 // pred_region
          #allocation19 [shape = 'u32[6]{0}', space=smem, size = 0x18, scoped, tag = 'DMA stride descriptor']
          %s1228 = smul.u32 2, %s40
          %s1230 = ssub.s32 512, 512
          %1231 = vsyncadd %s1203, %s1230
          %s1232 = smul.addr %s39, 2
          %s1233 = sadd.s32 %s1228, %s1232
          %s1234 = smul.addr %s1233, 64
          %s1235 = scalar_lea.hbm %s4, %s1234
          %s1237 = sshll.u32 1, 14
          %s1238 = sxor.u32 4294967295, %s1237
          %s1241 = sshll.u32 7, 18
          %s1242 = sxor.u32 4294967295, %s1241
          %s1243 = sand.u32 0, %s1242
          %s1245 = sor.u32 %s1243, 0
          %s1247 = sshll.u32 3, 24
          %s1248 = sxor.u32 4294967295, %s1247
          %s1249 = sand.u32 %s1245, %s1248
          %s1251 = sor.u32 %s1249, 0
          %s1252 = sshll.u32 %s1206, 4
          %s1253 = int_to_ptr.vmem [resolvable:$true] %s1252
          %1259 = sst [smem:[#allocation19]] 128
          %s1260 = scalar_lea.smem [#allocation19], 1
          %1261 = sst [smem:[%s1260]] 256
          %s1262 = scalar_lea.smem [#allocation19], 2
          %1263 = sst [smem:[%s1262]] 2
          %s1264 = scalar_lea.smem [#allocation19], 3
          %1265 = sst [smem:[%s1264]] 64
          %s1266 = scalar_lea.smem [#allocation19], 4
          %1267 = sst [smem:[%s1266]] 64
          %s1268 = scalar_lea.smem [#allocation19], 5
          %1269 = sst [smem:[%s1268]] 4
          %1271 = dma.general %s1253, 512, %s1235, %s1203, [#allocation18], [#allocation19], %s1251, 0
        $region56: #{tpu_custom_call.1} parent=35 // pred_fallthru
          _
        // Predicated region
        $region57: #{tpu_custom_call.1} parent=35 // pred_check
          %p1272 = pneg %p196
        $region58: #{tpu_custom_call.1} parent=35 // pred_check_branch
          %1274 = sbr.rel (%p1272) target = $region60
        $region59: #{tpu_custom_call.1} parent=35 // pred_region
          #allocation21 [shape = 'u32[6]{0}', space=smem, size = 0x18, scoped, tag = 'DMA stride descriptor']
          %s1275 = smul.u32 2, %s40
          %s1277 = ssub.s32 512, 512
          %1278 = vsyncadd %s1208, %s1277
          %s1279 = smul.addr %s39, 2
          %s1280 = sadd.s32 %s1275, %s1279
          %s1281 = smul.addr %s1280, 64
          %s1282 = scalar_lea.hbm %s5, %s1281
          %s1284 = sshll.u32 1, 14
          %s1285 = sxor.u32 4294967295, %s1284
          %s1288 = sshll.u32 7, 18
          %s1289 = sxor.u32 4294967295, %s1288
          %s1290 = sand.u32 0, %s1289
          %s1292 = sor.u32 %s1290, 0
          %s1294 = sshll.u32 3, 24
          %s1295 = sxor.u32 4294967295, %s1294
          %s1296 = sand.u32 %s1292, %s1295
          %s1298 = sor.u32 %s1296, 0
          %s1299 = sshll.u32 %s1211, 4
          %s1300 = int_to_ptr.vmem [resolvable:$true] %s1299
          %1306 = sst [smem:[#allocation21]] 128
          %s1307 = scalar_lea.smem [#allocation21], 1
          %1308 = sst [smem:[%s1307]] 256
          %s1309 = scalar_lea.smem [#allocation21], 2
          %1310 = sst [smem:[%s1309]] 2
          %s1311 = scalar_lea.smem [#allocation21], 3
          %1312 = sst [smem:[%s1311]] 64
          %s1313 = scalar_lea.smem [#allocation21], 4
          %1314 = sst [smem:[%s1313]] 64
          %s1315 = scalar_lea.smem [#allocation21], 5
          %1316 = sst [smem:[%s1315]] 4
          %1318 = dma.general %s1300, 512, %s1282, %s1208, [#allocation20], [#allocation21], %s1298, 0
        $region60: #{tpu_custom_call.1} parent=35 // pred_fallthru
          _
        // Predicated region
        $region61: #{tpu_custom_call.1} parent=35 // pred_check
          %p1319 = pneg %p222
        $region62: #{tpu_custom_call.1} parent=35 // pred_check_branch
          %1321 = sbr.rel (%p1319) target = $region64
        $region63: #{tpu_custom_call.1} parent=35 // pred_region
          %s1323 = ssub.s32 16, 16
          %1324 = vsyncadd %s1213, %s1323
          %s1325 = smul.addr %s39, 16
          %s1326 = scalar_lea.hbm %s6, %s1325
          %s1328 = sshll.u32 %s1215, 4
          %s1329 = int_to_ptr.vmem [resolvable:$true] %s1328
          %1331 = dma.vmem_to_hbm [thread:$0]  %s1329, 16, %s1326, %s1213
        $region64: #{tpu_custom_call.1} parent=35 // pred_fallthru
          _
        // Predicated region
        $region65: #{tpu_custom_call.1} parent=35 // pred_check
          %p1332 = pneg %p248
        $region66: #{tpu_custom_call.1} parent=35 // pred_check_branch
          %1334 = sbr.rel (%p1332) target = $region68
        $region67: #{tpu_custom_call.1} parent=35 // pred_region
          %s1336 = ssub.s32 16, 16
          %1337 = vsyncadd %s1217, %s1336
          %s1338 = smul.addr %s39, 16
          %s1339 = scalar_lea.hbm %s7, %s1338
          %s1341 = sshll.u32 %s1219, 4
          %s1342 = int_to_ptr.vmem [resolvable:$true] %s1341
          %1344 = dma.vmem_to_hbm [thread:$0]  %s1342, 16, %s1339, %s1217
        $region68: #{tpu_custom_call.1} parent=35 // pred_fallthru
          _
        // Predicated region
        $region69: #{tpu_custom_call.1} parent=35 // pred_check
          %p1345 = pneg %p274
        $region70: #{tpu_custom_call.1} parent=35 // pred_check_branch
          %1347 = sbr.rel (%p1345) target = $region72
        $region71: #{tpu_custom_call.1} parent=35 // pred_region
          %s1349 = ssub.s32 64, 64
          %1350 = vsyncadd %s1221, %s1349
          %s1351 = smul.addr %s39, 64
          %s1352 = scalar_lea.hbm %s8, %s1351
          %s1354 = sshll.u32 %s1224, 4
          %s1355 = int_to_ptr.vmem [resolvable:$true] %s1354
          %1357 = dma.vmem_to_hbm [thread:$0]  %s1355, 64, %s1352, %s1221
        $region72: #{tpu_custom_call.1} parent=35 // pred_fallthru
          _
      $region36: #{tpu_custom_call.1} parent=5 // pred_fallthru
        _
      %p1358 = scmp.le.s32.totalorder 2, %s30
      // Predicated region
      $region73: #{tpu_custom_call.1} parent=5 // pred_check
        %p1359 = pneg %p1358
      $region74: #{tpu_custom_call.1} parent=5 // pred_check_branch
        %1361 = sbr.rel (%p1359) target = $region76
      $region75: #{tpu_custom_call.1} parent=5 // pred_region
        %s1362 = ssub.s32 %s30, 2
        // Predicated region
        $region77: #{tpu_custom_call.1} parent=75 // pred_check
          %p1363 = pneg %p174
        $region78: #{tpu_custom_call.1} parent=75 // pred_check_branch
          %1365 = sbr.rel (%p1363) target = $region80
        $region79: #{tpu_custom_call.1} parent=75 // pred_region
          %s1366 = sand.u32 %s159, 1
          %s1367 = scalar_lea.sflag [#allocation8], %s1366
          %s1368 = sand.u32 %s159, 1
          %s1369 = smul.addr %s1368, 32
          %s1370 = scalar_lea.vmem [#allocation11], %s1369
          %1371 = dma.done %s1367, 512
        $region80: #{tpu_custom_call.1} parent=75 // pred_fallthru
          _
        // Predicated region
        $region81: #{tpu_custom_call.1} parent=75 // pred_check
          %p1372 = pneg %p202
        $region82: #{tpu_custom_call.1} parent=75 // pred_check_branch
          %1374 = sbr.rel (%p1372) target = $region84
        $region83: #{tpu_custom_call.1} parent=75 // pred_region
          %s1375 = sand.u32 %s36, 1
          %s1376 = scalar_lea.sflag [#allocation13], %s1375
          %s1377 = sand.u32 %s187, 1
          %s1378 = smul.addr %s1377, 32
          %s1379 = scalar_lea.vmem [#allocation12], %s1378
          %1380 = dma.done %s1376, 512
        $region84: #{tpu_custom_call.1} parent=75 // pred_fallthru
          _
        // Predicated region
        $region85: #{tpu_custom_call.1} parent=75 // pred_check
          %p1381 = pneg %p228
        $region86: #{tpu_custom_call.1} parent=75 // pred_check_branch
          %1383 = sbr.rel (%p1381) target = $region88
        $region87: #{tpu_custom_call.1} parent=75 // pred_region
          %s1384 = sand.u32 %s36, 1
          %s1385 = scalar_lea.sflag [#allocation13], %s1384
          %s1386 = sand.u32 %s213, 1
          %s1387 = scalar_lea.vmem [#allocation14], %s1386
          %1388 = dma.done %s1385, 16
        $region88: #{tpu_custom_call.1} parent=75 // pred_fallthru
          _
        // Predicated region
        $region89: #{tpu_custom_call.1} parent=75 // pred_check
          %p1389 = pneg %p254
        $region90: #{tpu_custom_call.1} parent=75 // pred_check_branch
          %1391 = sbr.rel (%p1389) target = $region92
        $region91: #{tpu_custom_call.1} parent=75 // pred_region
          %s1392 = sand.u32 %s36, 1
          %s1393 = scalar_lea.sflag [#allocation16], %s1392
          %s1394 = sand.u32 %s239, 1
          %s1395 = scalar_lea.vmem [#allocation15], %s1394
          %1396 = dma.done %s1393, 16
        $region92: #{tpu_custom_call.1} parent=75 // pred_fallthru
          _
        // Predicated region
        $region93: #{tpu_custom_call.1} parent=75 // pred_check
          %p1397 = pneg %p280
        $region94: #{tpu_custom_call.1} parent=75 // pred_check_branch
          %1399 = sbr.rel (%p1397) target = $region96
        $region95: #{tpu_custom_call.1} parent=75 // pred_region
          %s1400 = sand.u32 %s36, 1
          %s1401 = scalar_lea.sflag [#allocation16], %s1400
          %s1402 = sand.u32 %s265, 1
          %s1403 = smul.addr %s1402, 4
          %s1404 = scalar_lea.vmem [#allocation17], %s1403
          %1405 = dma.done %s1401, 64
        $region96: #{tpu_custom_call.1} parent=75 // pred_fallthru
          _
      $region76: #{tpu_custom_call.1} parent=5 // pred_fallthru
        _
    $region6: #{tpu_custom_call.1} parent=1 // loop_footer
      %s34 = sadd.s32 1, %s30
    $region7: #{tpu_custom_call.1} parent=1 // loop_footer_branch
      %29 = sbr.rel target = $region3
    $region8: #{tpu_custom_call.1} parent=1 // loop_exit
      _
    %1406 = vsyncpa [#allocation7], 1
    %s1407 = scalar_lea.sflag [#allocation7], 1
    %1408 = vsyncpa %s1407, 1
    %1409 = vsyncpa [#allocation10], 1
    %s1410 = scalar_lea.sflag [#allocation10], 1
    %1411 = vsyncpa %s1410, 1
    %1412 = vsyncpa [#allocation8], 1
    %s1413 = scalar_lea.sflag [#allocation8], 1
    %1414 = vsyncpa %s1413, 1
    %1415 = vsyncpa [#allocation13], 1
    %s1416 = scalar_lea.sflag [#allocation13], 1
    %1417 = vsyncpa %s1416, 1
    %1418 = vsyncpa [#allocation16], 1
    %s1419 = scalar_lea.sflag [#allocation16], 1
    %1420 = vsyncpa %s1419, 1

</llo_original>
